<compile_context>
chip_gen: v7x
topology: tpu7x:2x2x1
jax: 0.10.0
libtpu: 0.0.40
codegen_flags: <defaults>
</compile_context>

<pallas_src>
import functools

import jax
import jax.numpy as jnp
from jax.experimental import pallas as pl
from jax.experimental.pallas import tpu as pltpu

D_IN = 16
HIDDEN = 64          # PyTorch module default
DEPTH = 3
DEFAULT_BATCH_TILE = 4096   # rows per grid step (lane-dense: multiple of 128)


def _silu(v):
    # silu(v) = v * sigmoid(v); sigmoid(v) = 0.5*(1 + tanh(0.5*v))
    # -> a single EUP op (tanh) instead of exp + reciprocal.
    return v * (0.5 * jnp.tanh(0.5 * v) + 0.5)


def _round_up(n, m):
    return ((n + m - 1) // m) * m


def basenet_kernel(x_ref,
                   w_in_ref, b_in_ref,
                   w11_ref, b11_ref, w12_ref, b12_ref,
                   w21_ref, b21_ref, w22_ref, b22_ref,
                   w31_ref, b31_ref, w32_ref, b32_ref,
                   w_out_ref, b_out_ref,
                   out_ref):
    """Full BaseNet forward for one (features, batch_tile) activation tile.

    x_ref:   (d_in, batch_tile)  bf16   (batch on lanes)
    w*_ref:  (out_features, in_features) bf16  (pre-transposed)
    b*_ref:  (out_features, 1)   f32
    w_out:   (hidden, 1) f32,  b_out: (1, 1) f32
    out_ref: (1, batch_tile) f32  (lane-dense)
    """
    x = x_ref[...]                                            # bf16 (d_in, bt)

    # Input projection + SiLU (f32 accumulation, f32 elementwise).
    h = jnp.dot(w_in_ref[...], x, preferred_element_type=jnp.float32)
    h = _silu(h + b_in_ref[...])                              # f32 (hidden, bt)

    # 3 residual blocks: silu(h + lin2(drop(silu(lin1(h)))))   [drop = identity]
    blocks = ((w11_ref, b11_ref, w12_ref, b12_ref),
              (w21_ref, b21_ref, w22_ref, b22_ref),
              (w31_ref, b31_ref, w32_ref, b32_ref))
    for wa, ba, wb, bb in blocks:
        t = jnp.dot(wa[...], h.astype(jnp.bfloat16),
                    preferred_element_type=jnp.float32) + ba[...]
        t = _silu(t)
        t = jnp.dot(wb[...], t.astype(jnp.bfloat16),
                    preferred_element_type=jnp.float32) + bb[...]
        h = _silu(h + t)

    # Output head (hidden -> 1): cross-sublane reduce on the XLU instead of an
    # N=1 MXU matmul; the result is already lane-dense (1, batch_tile).
    out = jnp.sum(h * w_out_ref[...], axis=0, keepdims=True) + b_out_ref[...]
    out_ref[...] = out.astype(out_ref.dtype)


def init_params(key, d_in=D_IN, hidden=HIDDEN, depth=DEPTH):
    """Deterministic parameter init (uniform, PyTorch-Linear-like scaling).

    Returns the 'natural' (in_features, out_features) / (out_features,) layout;
    the wrapper converts to the kernel's transposed / bf16 layout.
    """
    params = []

    def linear(key, fan_in, fan_out):
        kw, kb = jax.random.split(key)
        bound = 1.0 / jnp.sqrt(jnp.float32(fan_in))
        w = jax.random.uniform(kw, (fan_in, fan_out), jnp.float32, -bound, bound)
        b = jax.random.uniform(kb, (fan_out,), jnp.float32, -bound, bound)
        return w, b

    keys = jax.random.split(key, 2 + 2 * depth)
    params.extend(linear(keys[0], d_in, hidden))          # input projection
    for i in range(depth):                                # residual blocks
        params.extend(linear(keys[1 + 2 * i], hidden, hidden))
        params.extend(linear(keys[2 + 2 * i], hidden, hidden))
    params.extend(linear(keys[-1], hidden, 1))            # output head
    return params


def _to_kernel_params(params):
    """Hidden-layer weights -> (out, in) bf16; biases -> (out, 1) f32."""
    kp = []
    for idx in range(0, len(params) - 2, 2):
        w, b = params[idx], params[idx + 1]
        kp.append(jnp.transpose(w).astype(jnp.bfloat16))      # (out, in) bf16
        kp.append(b.reshape(-1, 1).astype(jnp.float32))       # (out, 1)  f32
    w_out, b_out = params[-2], params[-1]
    kp.append(w_out.reshape(-1, 1).astype(jnp.float32))       # (hidden, 1) f32
    kp.append(b_out.reshape(1, 1).astype(jnp.float32))        # (1, 1)      f32
    return kp


@functools.partial(jax.jit, static_argnames=("batch_tile",))
def basenet_forward(x, params, batch_tile=DEFAULT_BATCH_TILE):
    B, d_in = x.shape

    # Lane-dense tile size: multiple of 128, clamped so tiny batches still work.
    batch_tile = _round_up(batch_tile, 128)
    batch_tile = min(batch_tile, _round_up(B, 128))
    num_tiles = -(-B // batch_tile)
    B_pad = num_tiles * batch_tile

    # Feature-major, bf16 streamed input: (d_in, B_pad), batch on lanes.
    x_t = jnp.transpose(x)
    if B_pad != B:
        x_t = jnp.pad(x_t, ((0, 0), (0, B_pad - B)))
    x_t = x_t.astype(jnp.bfloat16)

    kernel_params = _to_kernel_params(params)

    in_specs = [pl.BlockSpec((d_in, batch_tile), lambda i: (0, i))]
    # Parameters are tiny (<70 KiB total): keep the full arrays resident in
    # VMEM with a constant index_map (no per-step re-DMA).
    in_specs += [pl.BlockSpec(p.shape, lambda i: (0, 0)) for p in kernel_params]

    out = pl.pallas_call(
        basenet_kernel,
        out_shape=jax.ShapeDtypeStruct((1, B_pad), jnp.float32),
        grid_spec=pltpu.PrefetchScalarGridSpec(
            num_scalar_prefetch=0,
            grid=(num_tiles,),
            in_specs=in_specs,
            out_specs=pl.BlockSpec((1, batch_tile), lambda i: (0, i)),
        ),
        compiler_params=pltpu.CompilerParams(
            dimension_semantics=("parallel",)),   # shard tiles across TCs (v7x)
    )(x_t, *kernel_params)

    # (1, B_pad) lane-dense slab -> (B,)
    return out[0, :B]


def ref_forward(x, params, depth=DEPTH):
    """Pure-JAX f32 reference (module semantics: eval-mode dropout)."""
    w_in, b_in = params[0], params[1]
    h = jax.nn.silu(x @ w_in + b_in)
    for i in range(depth):
        wa, ba, wb, bb = params[2 + 4 * i: 6 + 4 * i]
        t = jax.nn.silu(h @ wa + ba)
        t = t @ wb + bb
        h = jax.nn.silu(h + t)
    w_out, b_out = params[-2], params[-1]
    return (h @ w_out + b_out)[:, 0]


if __name__ == "__main__":
    key = jax.random.PRNGKey(0)
    k_x, k_p = jax.random.split(key)

    # Small demo: B=500 exercises both padding (-> 512) and a 2-step grid.
    B = 500
    x = jax.random.normal(k_x, (B, D_IN), dtype=jnp.float32)
    params = init_params(k_p)

    y = basenet_forward(x, params, batch_tile=256)
    jax.block_until_ready(y)

    y_ref = ref_forward(x, params)
    assert y.shape == (B,)
    # bf16 matmul inputs (f32 accumulation) vs f32 reference -> relaxed tolerance.
    max_err = float(jnp.max(jnp.abs(y - y_ref)))
    assert jnp.allclose(y, y_ref, atol=5e-2, rtol=5e-2), max_err
    print("KERNEL_OK")
</pallas_src>

<mosaic_0001>
module attributes {stable_mosaic.version = 11 : i64} {
  func.func @basenet_kernel(%arg0: i32, %arg1: memref<16x256xbf16, #tpu.memory_space<vmem>>, %arg2: memref<64x16xbf16, #tpu.memory_space<vmem>>, %arg3: memref<64x1xf32, #tpu.memory_space<vmem>>, %arg4: memref<64x64xbf16, #tpu.memory_space<vmem>>, %arg5: memref<64x1xf32, #tpu.memory_space<vmem>>, %arg6: memref<64x64xbf16, #tpu.memory_space<vmem>>, %arg7: memref<64x1xf32, #tpu.memory_space<vmem>>, %arg8: memref<64x64xbf16, #tpu.memory_space<vmem>>, %arg9: memref<64x1xf32, #tpu.memory_space<vmem>>, %arg10: memref<64x64xbf16, #tpu.memory_space<vmem>>, %arg11: memref<64x1xf32, #tpu.memory_space<vmem>>, %arg12: memref<64x64xbf16, #tpu.memory_space<vmem>>, %arg13: memref<64x1xf32, #tpu.memory_space<vmem>>, %arg14: memref<64x64xbf16, #tpu.memory_space<vmem>>, %arg15: memref<64x1xf32, #tpu.memory_space<vmem>>, %arg16: memref<64x1xf32, #tpu.memory_space<vmem>>, %arg17: memref<1x1xf32, #tpu.memory_space<vmem>>, %arg18: memref<1x256xf32, #tpu.memory_space<vmem>>) attributes {dimension_semantics = [#tpu.dimension_semantics<parallel>], iteration_bounds = array<i64: 2>, scalar_prefetch = 0 : i64, scratch_operands = 0 : i64, tpu.core_type = #tpu.core_type<tc>, window_params = [{transform_indices = @transform_0, window_bounds = array<i64: 16, 256>}, {pipeline_mode = #tpu.pipeline_mode<synchronous>, transform_indices = @transform_1, window_bounds = array<i64: 64, 16>}, {pipeline_mode = #tpu.pipeline_mode<synchronous>, transform_indices = @transform_2, window_bounds = array<i64: 64, 1>}, {pipeline_mode = #tpu.pipeline_mode<synchronous>, transform_indices = @transform_3, window_bounds = array<i64: 64, 64>}, {pipeline_mode = #tpu.pipeline_mode<synchronous>, transform_indices = @transform_4, window_bounds = array<i64: 64, 1>}, {pipeline_mode = #tpu.pipeline_mode<synchronous>, transform_indices = @transform_5, window_bounds = array<i64: 64, 64>}, {pipeline_mode = #tpu.pipeline_mode<synchronous>, transform_indices = @transform_6, window_bounds = array<i64: 64, 1>}, {pipeline_mode = #tpu.pipeline_mode<synchronous>, transform_indices = @transform_7, window_bounds = array<i64: 64, 64>}, {pipeline_mode = #tpu.pipeline_mode<synchronous>, transform_indices = @transform_8, window_bounds = array<i64: 64, 1>}, {pipeline_mode = #tpu.pipeline_mode<synchronous>, transform_indices = @transform_9, window_bounds = array<i64: 64, 64>}, {pipeline_mode = #tpu.pipeline_mode<synchronous>, transform_indices = @transform_10, window_bounds = array<i64: 64, 1>}, {pipeline_mode = #tpu.pipeline_mode<synchronous>, transform_indices = @transform_11, window_bounds = array<i64: 64, 64>}, {pipeline_mode = #tpu.pipeline_mode<synchronous>, transform_indices = @transform_12, window_bounds = array<i64: 64, 1>}, {pipeline_mode = #tpu.pipeline_mode<synchronous>, transform_indices = @transform_13, window_bounds = array<i64: 64, 64>}, {pipeline_mode = #tpu.pipeline_mode<synchronous>, transform_indices = @transform_14, window_bounds = array<i64: 64, 1>}, {pipeline_mode = #tpu.pipeline_mode<synchronous>, transform_indices = @transform_15, window_bounds = array<i64: 64, 1>}, {pipeline_mode = #tpu.pipeline_mode<synchronous>, transform_indices = @transform_16, window_bounds = array<i64: 1, 1>}, {transform_indices = @transform_17, window_bounds = array<i64: 1, 256>}]} {
    %c0 = arith.constant 0 : index
    %c0_0 = arith.constant 0 : index
    %0 = vector.load %arg1[%c0, %c0_0] : memref<16x256xbf16, #tpu.memory_space<vmem>>, vector<16x256xbf16>
    %c0_1 = arith.constant 0 : index
    %c0_2 = arith.constant 0 : index
    %1 = vector.load %arg2[%c0_1, %c0_2] : memref<64x16xbf16, #tpu.memory_space<vmem>>, vector<64x16xbf16>
    %cst = arith.constant dense<0.000000e+00> : vector<64x256xf32>
    %2 = tpu.matmul %1, %0, %cst {dimension_numbers = #tpu.dot_dimension_numbers<[1], [0], [0], [1], [0, 0, 1, 1], [], []>} : vector<64x16xbf16>, vector<16x256xbf16>, vector<64x256xf32> -> vector<64x256xf32>
    %c0_3 = arith.constant 0 : index
    %c0_4 = arith.constant 0 : index
    %3 = vector.load %arg3[%c0_3, %c0_4] : memref<64x1xf32, #tpu.memory_space<vmem>>, vector<64x1xf32>
    %4 = vector.broadcast %3 : vector<64x1xf32> to vector<64x256xf32>
    %5 = arith.addf %2, %4 : vector<64x256xf32>
    %cst_5 = arith.constant 5.000000e-01 : f32
    %6 = vector.broadcast %cst_5 : f32 to vector<64x256xf32>
    %7 = arith.mulf %6, %5 : vector<64x256xf32>
    %8 = math.tanh %7 : vector<64x256xf32>
    %cst_6 = arith.constant 5.000000e-01 : f32
    %9 = vector.broadcast %cst_6 : f32 to vector<64x256xf32>
    %10 = arith.mulf %9, %8 : vector<64x256xf32>
    %cst_7 = arith.constant 5.000000e-01 : f32
    %11 = vector.broadcast %cst_7 : f32 to vector<64x256xf32>
    %12 = arith.addf %10, %11 : vector<64x256xf32>
    %13 = arith.mulf %5, %12 : vector<64x256xf32>
    %c0_8 = arith.constant 0 : index
    %c0_9 = arith.constant 0 : index
    %14 = vector.load %arg4[%c0_8, %c0_9] : memref<64x64xbf16, #tpu.memory_space<vmem>>, vector<64x64xbf16>
    %15 = arith.truncf %13 : vector<64x256xf32> to vector<64x256xbf16>
    %cst_10 = arith.constant dense<0.000000e+00> : vector<64x256xf32>
    %16 = tpu.matmul %14, %15, %cst_10 {dimension_numbers = #tpu.dot_dimension_numbers<[1], [0], [0], [1], [0, 0, 1, 1], [], []>} : vector<64x64xbf16>, vector<64x256xbf16>, vector<64x256xf32> -> vector<64x256xf32>
    %c0_11 = arith.constant 0 : index
    %c0_12 = arith.constant 0 : index
    %17 = vector.load %arg5[%c0_11, %c0_12] : memref<64x1xf32, #tpu.memory_space<vmem>>, vector<64x1xf32>
    %18 = vector.broadcast %17 : vector<64x1xf32> to vector<64x256xf32>
    %19 = arith.addf %16, %18 : vector<64x256xf32>
    %cst_13 = arith.constant 5.000000e-01 : f32
    %20 = vector.broadcast %cst_13 : f32 to vector<64x256xf32>
    %21 = arith.mulf %20, %19 : vector<64x256xf32>
    %22 = math.tanh %21 : vector<64x256xf32>
    %cst_14 = arith.constant 5.000000e-01 : f32
    %23 = vector.broadcast %cst_14 : f32 to vector<64x256xf32>
    %24 = arith.mulf %23, %22 : vector<64x256xf32>
    %cst_15 = arith.constant 5.000000e-01 : f32
    %25 = vector.broadcast %cst_15 : f32 to vector<64x256xf32>
    %26 = arith.addf %24, %25 : vector<64x256xf32>
    %27 = arith.mulf %19, %26 : vector<64x256xf32>
    %c0_16 = arith.constant 0 : index
    %c0_17 = arith.constant 0 : index
    %28 = vector.load %arg6[%c0_16, %c0_17] : memref<64x64xbf16, #tpu.memory_space<vmem>>, vector<64x64xbf16>
    %29 = arith.truncf %27 : vector<64x256xf32> to vector<64x256xbf16>
    %cst_18 = arith.constant dense<0.000000e+00> : vector<64x256xf32>
    %30 = tpu.matmul %28, %29, %cst_18 {dimension_numbers = #tpu.dot_dimension_numbers<[1], [0], [0], [1], [0, 0, 1, 1], [], []>} : vector<64x64xbf16>, vector<64x256xbf16>, vector<64x256xf32> -> vector<64x256xf32>
    %c0_19 = arith.constant 0 : index
    %c0_20 = arith.constant 0 : index
    %31 = vector.load %arg7[%c0_19, %c0_20] : memref<64x1xf32, #tpu.memory_space<vmem>>, vector<64x1xf32>
    %32 = vector.broadcast %31 : vector<64x1xf32> to vector<64x256xf32>
    %33 = arith.addf %30, %32 : vector<64x256xf32>
    %34 = arith.addf %13, %33 : vector<64x256xf32>
    %cst_21 = arith.constant 5.000000e-01 : f32
    %35 = vector.broadcast %cst_21 : f32 to vector<64x256xf32>
    %36 = arith.mulf %35, %34 : vector<64x256xf32>
    %37 = math.tanh %36 : vector<64x256xf32>
    %cst_22 = arith.constant 5.000000e-01 : f32
    %38 = vector.broadcast %cst_22 : f32 to vector<64x256xf32>
    %39 = arith.mulf %38, %37 : vector<64x256xf32>
    %cst_23 = arith.constant 5.000000e-01 : f32
    %40 = vector.broadcast %cst_23 : f32 to vector<64x256xf32>
    %41 = arith.addf %39, %40 : vector<64x256xf32>
    %42 = arith.mulf %34, %41 : vector<64x256xf32>
    %c0_24 = arith.constant 0 : index
    %c0_25 = arith.constant 0 : index
    %43 = vector.load %arg8[%c0_24, %c0_25] : memref<64x64xbf16, #tpu.memory_space<vmem>>, vector<64x64xbf16>
    %44 = arith.truncf %42 : vector<64x256xf32> to vector<64x256xbf16>
    %cst_26 = arith.constant dense<0.000000e+00> : vector<64x256xf32>
    %45 = tpu.matmul %43, %44, %cst_26 {dimension_numbers = #tpu.dot_dimension_numbers<[1], [0], [0], [1], [0, 0, 1, 1], [], []>} : vector<64x64xbf16>, vector<64x256xbf16>, vector<64x256xf32> -> vector<64x256xf32>
    %c0_27 = arith.constant 0 : index
    %c0_28 = arith.constant 0 : index
    %46 = vector.load %arg9[%c0_27, %c0_28] : memref<64x1xf32, #tpu.memory_space<vmem>>, vector<64x1xf32>
    %47 = vector.broadcast %46 : vector<64x1xf32> to vector<64x256xf32>
    %48 = arith.addf %45, %47 : vector<64x256xf32>
    %cst_29 = arith.constant 5.000000e-01 : f32
    %49 = vector.broadcast %cst_29 : f32 to vector<64x256xf32>
    %50 = arith.mulf %49, %48 : vector<64x256xf32>
    %51 = math.tanh %50 : vector<64x256xf32>
    %cst_30 = arith.constant 5.000000e-01 : f32
    %52 = vector.broadcast %cst_30 : f32 to vector<64x256xf32>
    %53 = arith.mulf %52, %51 : vector<64x256xf32>
    %cst_31 = arith.constant 5.000000e-01 : f32
    %54 = vector.broadcast %cst_31 : f32 to vector<64x256xf32>
    %55 = arith.addf %53, %54 : vector<64x256xf32>
    %56 = arith.mulf %48, %55 : vector<64x256xf32>
    %c0_32 = arith.constant 0 : index
    %c0_33 = arith.constant 0 : index
    %57 = vector.load %arg10[%c0_32, %c0_33] : memref<64x64xbf16, #tpu.memory_space<vmem>>, vector<64x64xbf16>
    %58 = arith.truncf %56 : vector<64x256xf32> to vector<64x256xbf16>
    %cst_34 = arith.constant dense<0.000000e+00> : vector<64x256xf32>
    %59 = tpu.matmul %57, %58, %cst_34 {dimension_numbers = #tpu.dot_dimension_numbers<[1], [0], [0], [1], [0, 0, 1, 1], [], []>} : vector<64x64xbf16>, vector<64x256xbf16>, vector<64x256xf32> -> vector<64x256xf32>
    %c0_35 = arith.constant 0 : index
    %c0_36 = arith.constant 0 : index
    %60 = vector.load %arg11[%c0_35, %c0_36] : memref<64x1xf32, #tpu.memory_space<vmem>>, vector<64x1xf32>
    %61 = vector.broadcast %60 : vector<64x1xf32> to vector<64x256xf32>
    %62 = arith.addf %59, %61 : vector<64x256xf32>
    %63 = arith.addf %42, %62 : vector<64x256xf32>
    %cst_37 = arith.constant 5.000000e-01 : f32
    %64 = vector.broadcast %cst_37 : f32 to vector<64x256xf32>
    %65 = arith.mulf %64, %63 : vector<64x256xf32>
    %66 = math.tanh %65 : vector<64x256xf32>
    %cst_38 = arith.constant 5.000000e-01 : f32
    %67 = vector.broadcast %cst_38 : f32 to vector<64x256xf32>
    %68 = arith.mulf %67, %66 : vector<64x256xf32>
    %cst_39 = arith.constant 5.000000e-01 : f32
    %69 = vector.broadcast %cst_39 : f32 to vector<64x256xf32>
    %70 = arith.addf %68, %69 : vector<64x256xf32>
    %71 = arith.mulf %63, %70 : vector<64x256xf32>
    %c0_40 = arith.constant 0 : index
    %c0_41 = arith.constant 0 : index
    %72 = vector.load %arg12[%c0_40, %c0_41] : memref<64x64xbf16, #tpu.memory_space<vmem>>, vector<64x64xbf16>
    %73 = arith.truncf %71 : vector<64x256xf32> to vector<64x256xbf16>
    %cst_42 = arith.constant dense<0.000000e+00> : vector<64x256xf32>
    %74 = tpu.matmul %72, %73, %cst_42 {dimension_numbers = #tpu.dot_dimension_numbers<[1], [0], [0], [1], [0, 0, 1, 1], [], []>} : vector<64x64xbf16>, vector<64x256xbf16>, vector<64x256xf32> -> vector<64x256xf32>
    %c0_43 = arith.constant 0 : index
    %c0_44 = arith.constant 0 : index
    %75 = vector.load %arg13[%c0_43, %c0_44] : memref<64x1xf32, #tpu.memory_space<vmem>>, vector<64x1xf32>
    %76 = vector.broadcast %75 : vector<64x1xf32> to vector<64x256xf32>
    %77 = arith.addf %74, %76 : vector<64x256xf32>
    %cst_45 = arith.constant 5.000000e-01 : f32
    %78 = vector.broadcast %cst_45 : f32 to vector<64x256xf32>
    %79 = arith.mulf %78, %77 : vector<64x256xf32>
    %80 = math.tanh %79 : vector<64x256xf32>
    %cst_46 = arith.constant 5.000000e-01 : f32
    %81 = vector.broadcast %cst_46 : f32 to vector<64x256xf32>
    %82 = arith.mulf %81, %80 : vector<64x256xf32>
    %cst_47 = arith.constant 5.000000e-01 : f32
    %83 = vector.broadcast %cst_47 : f32 to vector<64x256xf32>
    %84 = arith.addf %82, %83 : vector<64x256xf32>
    %85 = arith.mulf %77, %84 : vector<64x256xf32>
    %c0_48 = arith.constant 0 : index
    %c0_49 = arith.constant 0 : index
    %86 = vector.load %arg14[%c0_48, %c0_49] : memref<64x64xbf16, #tpu.memory_space<vmem>>, vector<64x64xbf16>
    %87 = arith.truncf %85 : vector<64x256xf32> to vector<64x256xbf16>
    %cst_50 = arith.constant dense<0.000000e+00> : vector<64x256xf32>
    %88 = tpu.matmul %86, %87, %cst_50 {dimension_numbers = #tpu.dot_dimension_numbers<[1], [0], [0], [1], [0, 0, 1, 1], [], []>} : vector<64x64xbf16>, vector<64x256xbf16>, vector<64x256xf32> -> vector<64x256xf32>
    %c0_51 = arith.constant 0 : index
    %c0_52 = arith.constant 0 : index
    %89 = vector.load %arg15[%c0_51, %c0_52] : memref<64x1xf32, #tpu.memory_space<vmem>>, vector<64x1xf32>
    %90 = vector.broadcast %89 : vector<64x1xf32> to vector<64x256xf32>
    %91 = arith.addf %88, %90 : vector<64x256xf32>
    %92 = arith.addf %71, %91 : vector<64x256xf32>
    %cst_53 = arith.constant 5.000000e-01 : f32
    %93 = vector.broadcast %cst_53 : f32 to vector<64x256xf32>
    %94 = arith.mulf %93, %92 : vector<64x256xf32>
    %95 = math.tanh %94 : vector<64x256xf32>
    %cst_54 = arith.constant 5.000000e-01 : f32
    %96 = vector.broadcast %cst_54 : f32 to vector<64x256xf32>
    %97 = arith.mulf %96, %95 : vector<64x256xf32>
    %cst_55 = arith.constant 5.000000e-01 : f32
    %98 = vector.broadcast %cst_55 : f32 to vector<64x256xf32>
    %99 = arith.addf %97, %98 : vector<64x256xf32>
    %100 = arith.mulf %92, %99 : vector<64x256xf32>
    %c0_56 = arith.constant 0 : index
    %c0_57 = arith.constant 0 : index
    %101 = vector.load %arg16[%c0_56, %c0_57] : memref<64x1xf32, #tpu.memory_space<vmem>>, vector<64x1xf32>
    %102 = vector.broadcast %101 : vector<64x1xf32> to vector<64x256xf32>
    %103 = arith.mulf %100, %102 : vector<64x256xf32>
    %cst_58 = arith.constant dense<0.000000e+00> : vector<256xf32>
    %104 = vector.multi_reduction <add>, %103, %cst_58 [0] : vector<64x256xf32> to vector<256xf32>
    %105 = vector.shape_cast %104 : vector<256xf32> to vector<1x256xf32>
    %c0_59 = arith.constant 0 : index
    %c0_60 = arith.constant 0 : index
    %106 = vector.load %arg17[%c0_59, %c0_60] : memref<1x1xf32, #tpu.memory_space<vmem>>, vector<1x1xf32>
    %107 = vector.broadcast %106 : vector<1x1xf32> to vector<1x256xf32>
    %108 = arith.addf %105, %107 : vector<1x256xf32>
    %c0_61 = arith.constant 0 : index
    %c0_62 = arith.constant 0 : index
    %109 = vector.load %arg18[%c0_61, %c0_62] : memref<1x256xf32, #tpu.memory_space<vmem>>, vector<1x256xf32>
    tpu.vector_store %arg18[%c0_61, %c0_62], %108 {strides = array<i32>} : memref<1x256xf32, #tpu.memory_space<vmem>>, vector<1x256xf32>,
    return
  }
  func.func @transform_0(%arg0: i32) -> (i32, i32) {
    %c0_i32 = arith.constant 0 : i32
    %c0_i32_0 = arith.constant 0 : i32
    return %c0_i32, %arg0 : i32, i32
  }
  func.func @transform_1(%arg0: i32) -> (i32, i32) {
    %c0_i32 = arith.constant 0 : i32
    %c0_i32_0 = arith.constant 0 : i32
    %c0_i32_1 = arith.constant 0 : i32
    return %c0_i32, %c0_i32_0 : i32, i32
  }
  func.func @transform_2(%arg0: i32) -> (i32, i32) {
    %c0_i32 = arith.constant 0 : i32
    %c0_i32_0 = arith.constant 0 : i32
    %c0_i32_1 = arith.constant 0 : i32
    return %c0_i32, %c0_i32_0 : i32, i32
  }
  func.func @transform_3(%arg0: i32) -> (i32, i32) {
    %c0_i32 = arith.constant 0 : i32
    %c0_i32_0 = arith.constant 0 : i32
    %c0_i32_1 = arith.constant 0 : i32
    return %c0_i32, %c0_i32_0 : i32, i32
  }
  func.func @transform_4(%arg0: i32) -> (i32, i32) {
    %c0_i32 = arith.constant 0 : i32
    %c0_i32_0 = arith.constant 0 : i32
    %c0_i32_1 = arith.constant 0 : i32
    return %c0_i32, %c0_i32_0 : i32, i32
  }
  func.func @transform_5(%arg0: i32) -> (i32, i32) {
    %c0_i32 = arith.constant 0 : i32
    %c0_i32_0 = arith.constant 0 : i32
    %c0_i32_1 = arith.constant 0 : i32
    return %c0_i32, %c0_i32_0 : i32, i32
  }
  func.func @transform_6(%arg0: i32) -> (i32, i32) {
    %c0_i32 = arith.constant 0 : i32
    %c0_i32_0 = arith.constant 0 : i32
    %c0_i32_1 = arith.constant 0 : i32
    return %c0_i32, %c0_i32_0 : i32, i32
  }
  func.func @transform_7(%arg0: i32) -> (i32, i32) {
    %c0_i32 = arith.constant 0 : i32
    %c0_i32_0 = arith.constant 0 : i32
    %c0_i32_1 = arith.constant 0 : i32
    return %c0_i32, %c0_i32_0 : i32, i32
  }
  func.func @transform_8(%arg0: i32) -> (i32, i32) {
    %c0_i32 = arith.constant 0 : i32
    %c0_i32_0 = arith.constant 0 : i32
    %c0_i32_1 = arith.constant 0 : i32
    return %c0_i32, %c0_i32_0 : i32, i32
  }
  func.func @transform_9(%arg0: i32) -> (i32, i32) {
    %c0_i32 = arith.constant 0 : i32
    %c0_i32_0 = arith.constant 0 : i32
    %c0_i32_1 = arith.constant 0 : i32
    return %c0_i32, %c0_i32_0 : i32, i32
  }
  func.func @transform_10(%arg0: i32) -> (i32, i32) {
    %c0_i32 = arith.constant 0 : i32
    %c0_i32_0 = arith.constant 0 : i32
    %c0_i32_1 = arith.constant 0 : i32
    return %c0_i32, %c0_i32_0 : i32, i32
  }
  func.func @transform_11(%arg0: i32) -> (i32, i32) {
    %c0_i32 = arith.constant 0 : i32
    %c0_i32_0 = arith.constant 0 : i32
    %c0_i32_1 = arith.constant 0 : i32
    return %c0_i32, %c0_i32_0 : i32, i32
  }
  func.func @transform_12(%arg0: i32) -> (i32, i32) {
    %c0_i32 = arith.constant 0 : i32
    %c0_i32_0 = arith.constant 0 : i32
    %c0_i32_1 = arith.constant 0 : i32
    return %c0_i32, %c0_i32_0 : i32, i32
  }
  func.func @transform_13(%arg0: i32) -> (i32, i32) {
    %c0_i32 = arith.constant 0 : i32
    %c0_i32_0 = arith.constant 0 : i32
    %c0_i32_1 = arith.constant 0 : i32
    return %c0_i32, %c0_i32_0 : i32, i32
  }
  func.func @transform_14(%arg0: i32) -> (i32, i32) {
    %c0_i32 = arith.constant 0 : i32
    %c0_i32_0 = arith.constant 0 : i32
    %c0_i32_1 = arith.constant 0 : i32
    return %c0_i32, %c0_i32_0 : i32, i32
  }
  func.func @transform_15(%arg0: i32) -> (i32, i32) {
    %c0_i32 = arith.constant 0 : i32
    %c0_i32_0 = arith.constant 0 : i32
    %c0_i32_1 = arith.constant 0 : i32
    return %c0_i32, %c0_i32_0 : i32, i32
  }
  func.func @transform_16(%arg0: i32) -> (i32, i32) {
    %c0_i32 = arith.constant 0 : i32
    %c0_i32_0 = arith.constant 0 : i32
    %c0_i32_1 = arith.constant 0 : i32
    return %c0_i32, %c0_i32_0 : i32, i32
  }
  func.func @transform_17(%arg0: i32) -> (i32, i32) {
    %c0_i32 = arith.constant 0 : i32
    %c0_i32_0 = arith.constant 0 : i32
    return %c0_i32, %arg0 : i32, i32
  }
}

</mosaic_0001>

<llo_original>
// kernel: basenet_forward.1
$region0: #{basenet_forward.1}
  #allocation0 [shape = 'u32[]', space=smem, size = 0x4, offset = 0x4, fixed_abs, tag = 'smem constant byte address 0x4 - core index']
  #allocation1 [shape = 'u32[144,128]{1,0:T(1,128)}', space=vmem, size = 0x12000, scoped, tag = 'internal scratch']
  #allocation2 [shape = 'f32[1,1]{1,0:T(1,128)S(1)}', space=vmem, size = 0x200, scoped, tag = 'scoped memory for basenet_forward.1']
  %s0 = inlined_call_operand.vmem [shape: bf16[16,512], index: 0, kind: input, shape index: {}]
  %s1 = inlined_call_operand.vmem [shape: bf16[64,16], index: 1, kind: input, shape index: {}]
  %s2 = inlined_call_operand.vmem [shape: f32[64,1], index: 2, kind: input, shape index: {}]
  %s3 = inlined_call_operand.vmem [shape: bf16[64,64], index: 3, kind: input, shape index: {}]
  %s4 = inlined_call_operand.vmem [shape: f32[64,1], index: 4, kind: input, shape index: {}]
  %s5 = inlined_call_operand.vmem [shape: bf16[64,64], index: 5, kind: input, shape index: {}]
  %s6 = inlined_call_operand.vmem [shape: f32[64,1], index: 6, kind: input, shape index: {}]
  %s7 = inlined_call_operand.vmem [shape: bf16[64,64], index: 7, kind: input, shape index: {}]
  %s8 = inlined_call_operand.vmem [shape: f32[64,1], index: 8, kind: input, shape index: {}]
  %s9 = inlined_call_operand.vmem [shape: bf16[64,64], index: 9, kind: input, shape index: {}]
  %s10 = inlined_call_operand.vmem [shape: f32[64,1], index: 10, kind: input, shape index: {}]
  %s11 = inlined_call_operand.vmem [shape: bf16[64,64], index: 11, kind: input, shape index: {}]
  %s12 = inlined_call_operand.vmem [shape: f32[64,1], index: 12, kind: input, shape index: {}]
  %s13 = inlined_call_operand.vmem [shape: bf16[64,64], index: 13, kind: input, shape index: {}]
  %s14 = inlined_call_operand.vmem [shape: f32[64,1], index: 14, kind: input, shape index: {}]
  %s15 = inlined_call_operand.vmem [shape: f32[64,1], index: 15, kind: input, shape index: {}]
  %s16 = inlined_call_operand.<no memory space> [shape: f32[1,1], index: 16, kind: input, shape index: {}]
  %s17 = inlined_call_operand.hbm [shape: f32[1,512], index: 17, kind: output, shape index: {}]
  %s18 = sld [smem:[#allocation0]]
  $region139: #{basenet_forward.1} parent=0
    _
  %s20 = ssub.s32 1, %s18
  %s21 = scalar_select 0, %s20, %s18
  %v22 = vstv %s16
  %23 = vst [vmem:[#allocation2] sm:$0x1] %v22
  $region1: #{basenet_forward.1} parent=0
    #allocation3 [shape = 'u8[16384]{0}', space=vmem, size = 0x4000, scoped, tag = 'input window, operand 0']
    #allocation4 [shape = 'u8[2048]{0}', space=vmem, size = 0x800, scoped, tag = 'output window, operand 0']
    #allocation5 [shape = 's32[2]{0}', space=sflag, size = 0x8, scoped, tag = 'scoped memory for basenet_forward.1']
    %24 = vsyncpa [#allocation5], 0
    %s25 = scalar_lea.sflag [#allocation5], 1
    %26 = vsyncpa %s25, 0
    loop: start=0, step=1, limit=4
    $region2: #{basenet_forward.1} parent=1 // loop_pre_header
      _
    $region3: #{basenet_forward.1} parent=1 // loop_header
      %s28 = sphi 0, %s32
      %p29 = scmp.ge.s32.totalorder %s28, 4
      %s38 = sphi 0, %s40
      %s41 = sphi 0, %s38
      %s42 = sphi 0, %s41
      %s58 = sphi 0, %s42
      %s62 = sphi 0, %s62
      %s64 = sphi 0, %s62
      %s65 = sphi 0, %s64
      %s79 = sphi 0, %s65
      %s83 = sphi 0, %s83
      %s85 = sphi 0, %s83
      %s86 = sphi 0, %s85
      %s100 = sphi 0, %s86
      %s104 = sphi 0, %s104
      %s106 = sphi 0, %s104
      %s107 = sphi 0, %s106
      %s121 = sphi 0, %s107
      %s125 = sphi 0, %s125
      %s127 = sphi 0, %s125
      %s128 = sphi 0, %s127
      %s142 = sphi 0, %s128
      %s146 = sphi 0, %s146
      %s148 = sphi 0, %s146
      %s149 = sphi 0, %s148
      %s163 = sphi 0, %s149
      %s167 = sphi 0, %s167
      %s169 = sphi 0, %s167
      %s170 = sphi 0, %s169
      %s184 = sphi 0, %s170
      %s188 = sphi 0, %s188
      %s190 = sphi 0, %s188
      %s191 = sphi 0, %s190
      %s205 = sphi 0, %s191
      %s209 = sphi 0, %s209
      %s211 = sphi 0, %s209
      %s212 = sphi 0, %s211
      %s226 = sphi 0, %s212
      %s230 = sphi 0, %s230
      %s232 = sphi 0, %s230
      %s233 = sphi 0, %s232
      %s247 = sphi 0, %s233
      %s251 = sphi 0, %s251
      %s253 = sphi 0, %s251
      %s254 = sphi 0, %s253
      %s268 = sphi 0, %s254
      %s272 = sphi 0, %s272
      %s274 = sphi 0, %s272
      %s275 = sphi 0, %s274
      %s289 = sphi 0, %s275
      %s293 = sphi 0, %s293
      %s295 = sphi 0, %s293
      %s296 = sphi 0, %s295
      %s310 = sphi 0, %s296
      %s314 = sphi 0, %s314
      %s316 = sphi 0, %s314
      %s317 = sphi 0, %s316
      %s331 = sphi 0, %s317
      %s335 = sphi 0, %s335
      %s337 = sphi 0, %s335
      %s338 = sphi 0, %s337
      %s352 = sphi 0, %s338
      %s356 = sphi 0, %s356
      %s358 = sphi 0, %s356
      %s359 = sphi 0, %s358
      %s373 = sphi 0, %s359
      %s377 = sphi 0, %s377
      %s379 = sphi 0, %s377
      %s380 = sphi 0, %s379
      %s394 = sphi 0, %s380
      %s400 = sphi 0, %s402
      %s403 = sphi 0, %s400
      %s404 = sphi 0, %s403
      %s420 = sphi 0, %s404
    $region4: #{basenet_forward.1} parent=1 // loop_header_branch
      %31 = sbr.rel (%p29) target = $region8
    $region5: #{basenet_forward.1} parent=1 // loop_body
      %s33 = ssub.s32 %s28, 1
      %s34 = ssub.s32 %s28, 2
      %s35 = sadd.s32 %s28, 1
      %s36 = ssub.s32 %s28, %s35
      %p37 = scmp.eq.s32.totalorder %s36, 0
      %s39 = sadd.s32 %s38, 1
      %s40 = scalar_select %p37, %s38, %s39
      %p43 = pneg %p37
      %p44 = scmp.eq.s32.totalorder %s28, 1
      %p45 = por %p43, %p44
      %p46 = scmp.ne.s32.totalorder %s38, %s41
      %p47 = scmp.eq.s32.totalorder %s28, 0
      %p48 = por %p46, %p47
      %p49 = scmp.ne.s32.totalorder %s38, %s41
      %p50 = scmp.eq.s32.totalorder %s33, 1
      %p51 = por %p49, %p50
      %p52 = scmp.ne.s32.totalorder %s41, %s42
      %p53 = scmp.eq.s32.totalorder %s33, 0
      %p54 = por %p52, %p53
      %p55 = scmp.ne.s32.totalorder %s41, %s42
      %p56 = scmp.eq.s32.totalorder %s34, 1
      %p57 = por %p55, %p56
      %p59 = scmp.ne.s32.totalorder %s42, %s58
      %p60 = scmp.eq.s32.totalorder %s34, 0
      %p61 = por %p59, %p60
      %s63 = sadd.s32 %s62, 1
      %p66 = scmp.eq.s32.totalorder %s28, 1
      %p67 = scmp.ne.s32.totalorder %s62, %s64
      %p68 = scmp.eq.s32.totalorder %s28, 0
      %p69 = por %p67, %p68
      %p70 = scmp.ne.s32.totalorder %s62, %s64
      %p71 = scmp.eq.s32.totalorder %s33, 1
      %p72 = por %p70, %p71
      %p73 = scmp.ne.s32.totalorder %s64, %s65
      %p74 = scmp.eq.s32.totalorder %s33, 0
      %p75 = por %p73, %p74
      %p76 = scmp.ne.s32.totalorder %s64, %s65
      %p77 = scmp.eq.s32.totalorder %s34, 1
      %p78 = por %p76, %p77
      %p80 = scmp.ne.s32.totalorder %s65, %s79
      %p81 = scmp.eq.s32.totalorder %s34, 0
      %p82 = por %p80, %p81
      %s84 = sadd.s32 %s83, 1
      %p87 = scmp.eq.s32.totalorder %s28, 1
      %p88 = scmp.ne.s32.totalorder %s83, %s85
      %p89 = scmp.eq.s32.totalorder %s28, 0
      %p90 = por %p88, %p89
      %p91 = scmp.ne.s32.totalorder %s83, %s85
      %p92 = scmp.eq.s32.totalorder %s33, 1
      %p93 = por %p91, %p92
      %p94 = scmp.ne.s32.totalorder %s85, %s86
      %p95 = scmp.eq.s32.totalorder %s33, 0
      %p96 = por %p94, %p95
      %p97 = scmp.ne.s32.totalorder %s85, %s86
      %p98 = scmp.eq.s32.totalorder %s34, 1
      %p99 = por %p97, %p98
      %p101 = scmp.ne.s32.totalorder %s86, %s100
      %p102 = scmp.eq.s32.totalorder %s34, 0
      %p103 = por %p101, %p102
      %s105 = sadd.s32 %s104, 1
      %p108 = scmp.eq.s32.totalorder %s28, 1
      %p109 = scmp.ne.s32.totalorder %s104, %s106
      %p110 = scmp.eq.s32.totalorder %s28, 0
      %p111 = por %p109, %p110
      %p112 = scmp.ne.s32.totalorder %s104, %s106
      %p113 = scmp.eq.s32.totalorder %s33, 1
      %p114 = por %p112, %p113
      %p115 = scmp.ne.s32.totalorder %s106, %s107
      %p116 = scmp.eq.s32.totalorder %s33, 0
      %p117 = por %p115, %p116
      %p118 = scmp.ne.s32.totalorder %s106, %s107
      %p119 = scmp.eq.s32.totalorder %s34, 1
      %p120 = por %p118, %p119
      %p122 = scmp.ne.s32.totalorder %s107, %s121
      %p123 = scmp.eq.s32.totalorder %s34, 0
      %p124 = por %p122, %p123
      %s126 = sadd.s32 %s125, 1
      %p129 = scmp.eq.s32.totalorder %s28, 1
      %p130 = scmp.ne.s32.totalorder %s125, %s127
      %p131 = scmp.eq.s32.totalorder %s28, 0
      %p132 = por %p130, %p131
      %p133 = scmp.ne.s32.totalorder %s125, %s127
      %p134 = scmp.eq.s32.totalorder %s33, 1
      %p135 = por %p133, %p134
      %p136 = scmp.ne.s32.totalorder %s127, %s128
      %p137 = scmp.eq.s32.totalorder %s33, 0
      %p138 = por %p136, %p137
      %p139 = scmp.ne.s32.totalorder %s127, %s128
      %p140 = scmp.eq.s32.totalorder %s34, 1
      %p141 = por %p139, %p140
      %p143 = scmp.ne.s32.totalorder %s128, %s142
      %p144 = scmp.eq.s32.totalorder %s34, 0
      %p145 = por %p143, %p144
      %s147 = sadd.s32 %s146, 1
      %p150 = scmp.eq.s32.totalorder %s28, 1
      %p151 = scmp.ne.s32.totalorder %s146, %s148
      %p152 = scmp.eq.s32.totalorder %s28, 0
      %p153 = por %p151, %p152
      %p154 = scmp.ne.s32.totalorder %s146, %s148
      %p155 = scmp.eq.s32.totalorder %s33, 1
      %p156 = por %p154, %p155
      %p157 = scmp.ne.s32.totalorder %s148, %s149
      %p158 = scmp.eq.s32.totalorder %s33, 0
      %p159 = por %p157, %p158
      %p160 = scmp.ne.s32.totalorder %s148, %s149
      %p161 = scmp.eq.s32.totalorder %s34, 1
      %p162 = por %p160, %p161
      %p164 = scmp.ne.s32.totalorder %s149, %s163
      %p165 = scmp.eq.s32.totalorder %s34, 0
      %p166 = por %p164, %p165
      %s168 = sadd.s32 %s167, 1
      %p171 = scmp.eq.s32.totalorder %s28, 1
      %p172 = scmp.ne.s32.totalorder %s167, %s169
      %p173 = scmp.eq.s32.totalorder %s28, 0
      %p174 = por %p172, %p173
      %p175 = scmp.ne.s32.totalorder %s167, %s169
      %p176 = scmp.eq.s32.totalorder %s33, 1
      %p177 = por %p175, %p176
      %p178 = scmp.ne.s32.totalorder %s169, %s170
      %p179 = scmp.eq.s32.totalorder %s33, 0
      %p180 = por %p178, %p179
      %p181 = scmp.ne.s32.totalorder %s169, %s170
      %p182 = scmp.eq.s32.totalorder %s34, 1
      %p183 = por %p181, %p182
      %p185 = scmp.ne.s32.totalorder %s170, %s184
      %p186 = scmp.eq.s32.totalorder %s34, 0
      %p187 = por %p185, %p186
      %s189 = sadd.s32 %s188, 1
      %p192 = scmp.eq.s32.totalorder %s28, 1
      %p193 = scmp.ne.s32.totalorder %s188, %s190
      %p194 = scmp.eq.s32.totalorder %s28, 0
      %p195 = por %p193, %p194
      %p196 = scmp.ne.s32.totalorder %s188, %s190
      %p197 = scmp.eq.s32.totalorder %s33, 1
      %p198 = por %p196, %p197
      %p199 = scmp.ne.s32.totalorder %s190, %s191
      %p200 = scmp.eq.s32.totalorder %s33, 0
      %p201 = por %p199, %p200
      %p202 = scmp.ne.s32.totalorder %s190, %s191
      %p203 = scmp.eq.s32.totalorder %s34, 1
      %p204 = por %p202, %p203
      %p206 = scmp.ne.s32.totalorder %s191, %s205
      %p207 = scmp.eq.s32.totalorder %s34, 0
      %p208 = por %p206, %p207
      %s210 = sadd.s32 %s209, 1
      %p213 = scmp.eq.s32.totalorder %s28, 1
      %p214 = scmp.ne.s32.totalorder %s209, %s211
      %p215 = scmp.eq.s32.totalorder %s28, 0
      %p216 = por %p214, %p215
      %p217 = scmp.ne.s32.totalorder %s209, %s211
      %p218 = scmp.eq.s32.totalorder %s33, 1
      %p219 = por %p217, %p218
      %p220 = scmp.ne.s32.totalorder %s211, %s212
      %p221 = scmp.eq.s32.totalorder %s33, 0
      %p222 = por %p220, %p221
      %p223 = scmp.ne.s32.totalorder %s211, %s212
      %p224 = scmp.eq.s32.totalorder %s34, 1
      %p225 = por %p223, %p224
      %p227 = scmp.ne.s32.totalorder %s212, %s226
      %p228 = scmp.eq.s32.totalorder %s34, 0
      %p229 = por %p227, %p228
      %s231 = sadd.s32 %s230, 1
      %p234 = scmp.eq.s32.totalorder %s28, 1
      %p235 = scmp.ne.s32.totalorder %s230, %s232
      %p236 = scmp.eq.s32.totalorder %s28, 0
      %p237 = por %p235, %p236
      %p238 = scmp.ne.s32.totalorder %s230, %s232
      %p239 = scmp.eq.s32.totalorder %s33, 1
      %p240 = por %p238, %p239
      %p241 = scmp.ne.s32.totalorder %s232, %s233
      %p242 = scmp.eq.s32.totalorder %s33, 0
      %p243 = por %p241, %p242
      %p244 = scmp.ne.s32.totalorder %s232, %s233
      %p245 = scmp.eq.s32.totalorder %s34, 1
      %p246 = por %p244, %p245
      %p248 = scmp.ne.s32.totalorder %s233, %s247
      %p249 = scmp.eq.s32.totalorder %s34, 0
      %p250 = por %p248, %p249
      %s252 = sadd.s32 %s251, 1
      %p255 = scmp.eq.s32.totalorder %s28, 1
      %p256 = scmp.ne.s32.totalorder %s251, %s253
      %p257 = scmp.eq.s32.totalorder %s28, 0
      %p258 = por %p256, %p257
      %p259 = scmp.ne.s32.totalorder %s251, %s253
      %p260 = scmp.eq.s32.totalorder %s33, 1
      %p261 = por %p259, %p260
      %p262 = scmp.ne.s32.totalorder %s253, %s254
      %p263 = scmp.eq.s32.totalorder %s33, 0
      %p264 = por %p262, %p263
      %p265 = scmp.ne.s32.totalorder %s253, %s254
      %p266 = scmp.eq.s32.totalorder %s34, 1
      %p267 = por %p265, %p266
      %p269 = scmp.ne.s32.totalorder %s254, %s268
      %p270 = scmp.eq.s32.totalorder %s34, 0
      %p271 = por %p269, %p270
      %s273 = sadd.s32 %s272, 1
      %p276 = scmp.eq.s32.totalorder %s28, 1
      %p277 = scmp.ne.s32.totalorder %s272, %s274
      %p278 = scmp.eq.s32.totalorder %s28, 0
      %p279 = por %p277, %p278
      %p280 = scmp.ne.s32.totalorder %s272, %s274
      %p281 = scmp.eq.s32.totalorder %s33, 1
      %p282 = por %p280, %p281
      %p283 = scmp.ne.s32.totalorder %s274, %s275
      %p284 = scmp.eq.s32.totalorder %s33, 0
      %p285 = por %p283, %p284
      %p286 = scmp.ne.s32.totalorder %s274, %s275
      %p287 = scmp.eq.s32.totalorder %s34, 1
      %p288 = por %p286, %p287
      %p290 = scmp.ne.s32.totalorder %s275, %s289
      %p291 = scmp.eq.s32.totalorder %s34, 0
      %p292 = por %p290, %p291
      %s294 = sadd.s32 %s293, 1
      %p297 = scmp.eq.s32.totalorder %s28, 1
      %p298 = scmp.ne.s32.totalorder %s293, %s295
      %p299 = scmp.eq.s32.totalorder %s28, 0
      %p300 = por %p298, %p299
      %p301 = scmp.ne.s32.totalorder %s293, %s295
      %p302 = scmp.eq.s32.totalorder %s33, 1
      %p303 = por %p301, %p302
      %p304 = scmp.ne.s32.totalorder %s295, %s296
      %p305 = scmp.eq.s32.totalorder %s33, 0
      %p306 = por %p304, %p305
      %p307 = scmp.ne.s32.totalorder %s295, %s296
      %p308 = scmp.eq.s32.totalorder %s34, 1
      %p309 = por %p307, %p308
      %p311 = scmp.ne.s32.totalorder %s296, %s310
      %p312 = scmp.eq.s32.totalorder %s34, 0
      %p313 = por %p311, %p312
      %s315 = sadd.s32 %s314, 1
      %p318 = scmp.eq.s32.totalorder %s28, 1
      %p319 = scmp.ne.s32.totalorder %s314, %s316
      %p320 = scmp.eq.s32.totalorder %s28, 0
      %p321 = por %p319, %p320
      %p322 = scmp.ne.s32.totalorder %s314, %s316
      %p323 = scmp.eq.s32.totalorder %s33, 1
      %p324 = por %p322, %p323
      %p325 = scmp.ne.s32.totalorder %s316, %s317
      %p326 = scmp.eq.s32.totalorder %s33, 0
      %p327 = por %p325, %p326
      %p328 = scmp.ne.s32.totalorder %s316, %s317
      %p329 = scmp.eq.s32.totalorder %s34, 1
      %p330 = por %p328, %p329
      %p332 = scmp.ne.s32.totalorder %s317, %s331
      %p333 = scmp.eq.s32.totalorder %s34, 0
      %p334 = por %p332, %p333
      %s336 = sadd.s32 %s335, 1
      %p339 = scmp.eq.s32.totalorder %s28, 1
      %p340 = scmp.ne.s32.totalorder %s335, %s337
      %p341 = scmp.eq.s32.totalorder %s28, 0
      %p342 = por %p340, %p341
      %p343 = scmp.ne.s32.totalorder %s335, %s337
      %p344 = scmp.eq.s32.totalorder %s33, 1
      %p345 = por %p343, %p344
      %p346 = scmp.ne.s32.totalorder %s337, %s338
      %p347 = scmp.eq.s32.totalorder %s33, 0
      %p348 = por %p346, %p347
      %p349 = scmp.ne.s32.totalorder %s337, %s338
      %p350 = scmp.eq.s32.totalorder %s34, 1
      %p351 = por %p349, %p350
      %p353 = scmp.ne.s32.totalorder %s338, %s352
      %p354 = scmp.eq.s32.totalorder %s34, 0
      %p355 = por %p353, %p354
      %s357 = sadd.s32 %s356, 1
      %p360 = scmp.eq.s32.totalorder %s28, 1
      %p361 = scmp.ne.s32.totalorder %s356, %s358
      %p362 = scmp.eq.s32.totalorder %s28, 0
      %p363 = por %p361, %p362
      %p364 = scmp.ne.s32.totalorder %s356, %s358
      %p365 = scmp.eq.s32.totalorder %s33, 1
      %p366 = por %p364, %p365
      %p367 = scmp.ne.s32.totalorder %s358, %s359
      %p368 = scmp.eq.s32.totalorder %s33, 0
      %p369 = por %p367, %p368
      %p370 = scmp.ne.s32.totalorder %s358, %s359
      %p371 = scmp.eq.s32.totalorder %s34, 1
      %p372 = por %p370, %p371
      %p374 = scmp.ne.s32.totalorder %s359, %s373
      %p375 = scmp.eq.s32.totalorder %s34, 0
      %p376 = por %p374, %p375
      %s378 = sadd.s32 %s377, 1
      %p381 = scmp.eq.s32.totalorder %s28, 1
      %p382 = scmp.ne.s32.totalorder %s377, %s379
      %p383 = scmp.eq.s32.totalorder %s28, 0
      %p384 = por %p382, %p383
      %p385 = scmp.ne.s32.totalorder %s377, %s379
      %p386 = scmp.eq.s32.totalorder %s33, 1
      %p387 = por %p385, %p386
      %p388 = scmp.ne.s32.totalorder %s379, %s380
      %p389 = scmp.eq.s32.totalorder %s33, 0
      %p390 = por %p388, %p389
      %p391 = scmp.ne.s32.totalorder %s379, %s380
      %p392 = scmp.eq.s32.totalorder %s34, 1
      %p393 = por %p391, %p392
      %p395 = scmp.ne.s32.totalorder %s380, %s394
      %p396 = scmp.eq.s32.totalorder %s34, 0
      %p397 = por %p395, %p396
      %s398 = ssub.s32 %s28, %s35
      %p399 = scmp.eq.s32.totalorder %s398, 0
      %s401 = sadd.s32 %s400, 1
      %s402 = scalar_select %p399, %s400, %s401
      %p405 = pneg %p399
      %p406 = scmp.eq.s32.totalorder %s28, 1
      %p407 = por %p405, %p406
      %p408 = scmp.ne.s32.totalorder %s400, %s403
      %p409 = scmp.eq.s32.totalorder %s28, 0
      %p410 = por %p408, %p409
      %p411 = scmp.ne.s32.totalorder %s400, %s403
      %p412 = scmp.eq.s32.totalorder %s33, 1
      %p413 = por %p411, %p412
      %p414 = scmp.ne.s32.totalorder %s403, %s404
      %p415 = scmp.eq.s32.totalorder %s33, 0
      %p416 = por %p414, %p415
      %p417 = scmp.ne.s32.totalorder %s403, %s404
      %p418 = scmp.eq.s32.totalorder %s34, 1
      %p419 = por %p417, %p418
      %p421 = scmp.ne.s32.totalorder %s404, %s420
      %p422 = scmp.eq.s32.totalorder %s34, 0
      %p423 = por %p421, %p422
      %p424 = scmp.le.s32.totalorder 1, %s28
      %p425 = scmp.lt.s32.totalorder %s28, 3
      %p426 = pnand %p424, %p425
      %p427 = pneg %p426
      // Predicated region
      $region9: #{basenet_forward.1} parent=5 // pred_check
        _
      $region10: #{basenet_forward.1} parent=5 // pred_check_branch
        %429 = sbr.rel (%p426) target = $region12
      $region11: #{basenet_forward.1} parent=5 // pred_region
        %s430 = ssub.s32 %s28, 1
        // Predicated region
        $region13: #{basenet_forward.1} parent=11 // pred_check
          %p431 = pneg %p75
        $region14: #{basenet_forward.1} parent=11 // pred_check_branch
          %433 = sbr.rel (%p431) target = $region16
        $region15: #{basenet_forward.1} parent=11 // pred_region
          _
        $region16: #{basenet_forward.1} parent=11 // pred_fallthru
          _
        // Predicated region
        $region17: #{basenet_forward.1} parent=11 // pred_check
          %p434 = pneg %p96
        $region18: #{basenet_forward.1} parent=11 // pred_check_branch
          %436 = sbr.rel (%p434) target = $region20
        $region19: #{basenet_forward.1} parent=11 // pred_region
          _
        $region20: #{basenet_forward.1} parent=11 // pred_fallthru
          _
        // Predicated region
        $region21: #{basenet_forward.1} parent=11 // pred_check
          %p437 = pneg %p117
        $region22: #{basenet_forward.1} parent=11 // pred_check_branch
          %439 = sbr.rel (%p437) target = $region24
        $region23: #{basenet_forward.1} parent=11 // pred_region
          _
        $region24: #{basenet_forward.1} parent=11 // pred_fallthru
          _
        // Predicated region
        $region25: #{basenet_forward.1} parent=11 // pred_check
          %p440 = pneg %p138
        $region26: #{basenet_forward.1} parent=11 // pred_check_branch
          %442 = sbr.rel (%p440) target = $region28
        $region27: #{basenet_forward.1} parent=11 // pred_region
          _
        $region28: #{basenet_forward.1} parent=11 // pred_fallthru
          _
        // Predicated region
        $region29: #{basenet_forward.1} parent=11 // pred_check
          %p443 = pneg %p159
        $region30: #{basenet_forward.1} parent=11 // pred_check_branch
          %445 = sbr.rel (%p443) target = $region32
        $region31: #{basenet_forward.1} parent=11 // pred_region
          _
        $region32: #{basenet_forward.1} parent=11 // pred_fallthru
          _
        // Predicated region
        $region33: #{basenet_forward.1} parent=11 // pred_check
          %p446 = pneg %p180
        $region34: #{basenet_forward.1} parent=11 // pred_check_branch
          %448 = sbr.rel (%p446) target = $region36
        $region35: #{basenet_forward.1} parent=11 // pred_region
          _
        $region36: #{basenet_forward.1} parent=11 // pred_fallthru
          _
        // Predicated region
        $region37: #{basenet_forward.1} parent=11 // pred_check
          %p449 = pneg %p201
        $region38: #{basenet_forward.1} parent=11 // pred_check_branch
          %451 = sbr.rel (%p449) target = $region40
        $region39: #{basenet_forward.1} parent=11 // pred_region
          _
        $region40: #{basenet_forward.1} parent=11 // pred_fallthru
          _
        // Predicated region
        $region41: #{basenet_forward.1} parent=11 // pred_check
          %p452 = pneg %p222
        $region42: #{basenet_forward.1} parent=11 // pred_check_branch
          %454 = sbr.rel (%p452) target = $region44
        $region43: #{basenet_forward.1} parent=11 // pred_region
          _
        $region44: #{basenet_forward.1} parent=11 // pred_fallthru
          _
        // Predicated region
        $region45: #{basenet_forward.1} parent=11 // pred_check
          %p455 = pneg %p243
        $region46: #{basenet_forward.1} parent=11 // pred_check_branch
          %457 = sbr.rel (%p455) target = $region48
        $region47: #{basenet_forward.1} parent=11 // pred_region
          _
        $region48: #{basenet_forward.1} parent=11 // pred_fallthru
          _
        // Predicated region
        $region49: #{basenet_forward.1} parent=11 // pred_check
          %p458 = pneg %p264
        $region50: #{basenet_forward.1} parent=11 // pred_check_branch
          %460 = sbr.rel (%p458) target = $region52
        $region51: #{basenet_forward.1} parent=11 // pred_region
          _
        $region52: #{basenet_forward.1} parent=11 // pred_fallthru
          _
        // Predicated region
        $region53: #{basenet_forward.1} parent=11 // pred_check
          %p461 = pneg %p285
        $region54: #{basenet_forward.1} parent=11 // pred_check_branch
          %463 = sbr.rel (%p461) target = $region56
        $region55: #{basenet_forward.1} parent=11 // pred_region
          _
        $region56: #{basenet_forward.1} parent=11 // pred_fallthru
          _
        // Predicated region
        $region57: #{basenet_forward.1} parent=11 // pred_check
          %p464 = pneg %p306
        $region58: #{basenet_forward.1} parent=11 // pred_check_branch
          %466 = sbr.rel (%p464) target = $region60
        $region59: #{basenet_forward.1} parent=11 // pred_region
          _
        $region60: #{basenet_forward.1} parent=11 // pred_fallthru
          _
        // Predicated region
        $region61: #{basenet_forward.1} parent=11 // pred_check
          %p467 = pneg %p327
        $region62: #{basenet_forward.1} parent=11 // pred_check_branch
          %469 = sbr.rel (%p467) target = $region64
        $region63: #{basenet_forward.1} parent=11 // pred_region
          _
        $region64: #{basenet_forward.1} parent=11 // pred_fallthru
          _
        // Predicated region
        $region65: #{basenet_forward.1} parent=11 // pred_check
          %p470 = pneg %p348
        $region66: #{basenet_forward.1} parent=11 // pred_check_branch
          %472 = sbr.rel (%p470) target = $region68
        $region67: #{basenet_forward.1} parent=11 // pred_region
          _
        $region68: #{basenet_forward.1} parent=11 // pred_fallthru
          _
        // Predicated region
        $region69: #{basenet_forward.1} parent=11 // pred_check
          %p473 = pneg %p369
        $region70: #{basenet_forward.1} parent=11 // pred_check_branch
          %475 = sbr.rel (%p473) target = $region72
        $region71: #{basenet_forward.1} parent=11 // pred_region
          _
        $region72: #{basenet_forward.1} parent=11 // pred_fallthru
          _
        // Predicated region
        $region73: #{basenet_forward.1} parent=11 // pred_check
          %p476 = pneg %p390
        $region74: #{basenet_forward.1} parent=11 // pred_check_branch
          %478 = sbr.rel (%p476) target = $region76
        $region75: #{basenet_forward.1} parent=11 // pred_region
          _
        $region76: #{basenet_forward.1} parent=11 // pred_fallthru
          _
      $region12: #{basenet_forward.1} parent=5 // pred_fallthru
        _
      %p479 = scmp.lt.s32.totalorder %s28, 2
      // Predicated region
      $region77: #{basenet_forward.1} parent=5 // pred_check
        %p480 = pneg %p479
      $region78: #{basenet_forward.1} parent=5 // pred_check_branch
        %482 = sbr.rel (%p480) target = $region80
      $region79: #{basenet_forward.1} parent=5 // pred_region
        // Predicated region
        $region81: #{basenet_forward.1} parent=79 // pred_check
          %p483 = pneg %p48
        $region82: #{basenet_forward.1} parent=79 // pred_check_branch
          %485 = sbr.rel (%p483) target = $region84
        $region83: #{basenet_forward.1} parent=79 // pred_region
          %s486 = sand.u32 %s38, 1
          %s487 = sand.u32 %s38, 1
          %s488 = smul.addr %s487, 16
          %s489 = scalar_lea.vmem [#allocation3], %s488
          %s490 = smul.u32 2, %s28
          %s491 = smul.addr %s490, 4
          %s492 = scalar_lea.vmem %s0, %s491
          // Predicated region
          $region85: #{basenet_forward.1} parent=83 // pred_check
            _
          $region86: #{basenet_forward.1} parent=83 // pred_check_branch
            %494 = sbr.rel (0) target = $region88
          $region87: #{basenet_forward.1} parent=83 // pred_region
            // Predicated region
            $region89: #{basenet_forward.1} parent=87 // pred_check
              _
            $region90: #{basenet_forward.1} parent=87 // pred_check_branch
              %496 = sbr.rel (0) target = $region92
            $region91: #{basenet_forward.1} parent=87 // pred_region
              // Predicated region
              $region104: #{basenet_forward.1} parent=91 // pred_check
                _
              $region105: #{basenet_forward.1} parent=91 // pred_check_branch
                %513 = sbr.rel (0) target = $region107
              $region106: #{basenet_forward.1} parent=91 // pred_region
                loop: start=0, step=1, limit=1
                $region108: #{basenet_forward.1} parent=106 // loop_pre_header
                  _
                $region109: #{basenet_forward.1} parent=106 // loop_header
                  %s515 = sphi 0, %s519
                  %p516 = scmp.ge.s32.totalorder %s515, 1
                  %s520 = sphi %s492, %s492
                  %s521 = sphi %s489, %s489
                $region110: #{basenet_forward.1} parent=106 // loop_header_branch
                  %518 = sbr.rel (%p516) target = $region114
                $region111: #{basenet_forward.1} parent=106 // loop_body
                  %v522 = vld [vmem:[%s520] sm:$0xff]
                  %523 = vst [vmem:[%s521] sm:$0xff] %v522
                  %v524 = vld [vmem:[%s520 + $0x10] sm:$0xff]
                  %525 = vst [vmem:[%s521 + $0x8] sm:$0xff] %v524
                $region112: #{basenet_forward.1} parent=106 // loop_footer
                  %s519 = sadd.s32 1, %s515
                $region113: #{basenet_forward.1} parent=106 // loop_footer_branch
                  %514 = sbr.rel target = $region109
                $region114: #{basenet_forward.1} parent=106 // loop_exit
                  _
              $region107: #{basenet_forward.1} parent=91 // pred_fallthru
                _
              // Predicated region
              $region115: #{basenet_forward.1} parent=91 // pred_check
                _
              $region116: #{basenet_forward.1} parent=91 // pred_check_branch
                %527 = sbr.rel target = $region118
              $region117: #{basenet_forward.1} parent=91 // pred_region
                _
              $region118: #{basenet_forward.1} parent=91 // pred_fallthru
                _
            $region92: #{basenet_forward.1} parent=87 // pred_fallthru
              _
            // Predicated region
            $region93: #{basenet_forward.1} parent=87 // pred_check
              _
            $region94: #{basenet_forward.1} parent=87 // pred_check_branch
              %498 = sbr.rel target = $region96
            $region95: #{basenet_forward.1} parent=87 // pred_region
              loop: start=0, step=1, limit=1
              $region97: #{basenet_forward.1} parent=95 // loop_pre_header
                _
              $region98: #{basenet_forward.1} parent=95 // loop_header
                %s501 = sphi 0, %s505
                %p502 = scmp.ge.s32.totalorder %s501, 1
                %s506 = sphi %s492, %s492
                %s507 = sphi %s489, %s489
              $region99: #{basenet_forward.1} parent=95 // loop_header_branch
                %504 = sbr.rel (%p502) target = $region103
              $region100: #{basenet_forward.1} parent=95 // loop_body
                %v508 = vld [vmem:[%s506] sm:$0xff]
                %509 = vst [vmem:[%s507] sm:$0xff] %v508
                %v510 = vld [vmem:[%s506 + $0x10] sm:$0xff]
                %511 = vst [vmem:[%s507 + $0x8] sm:$0xff] %v510
              $region101: #{basenet_forward.1} parent=95 // loop_footer
                %s505 = sadd.s32 1, %s501
              $region102: #{basenet_forward.1} parent=95 // loop_footer_branch
                %500 = sbr.rel target = $region98
              $region103: #{basenet_forward.1} parent=95 // loop_exit
                _
            $region96: #{basenet_forward.1} parent=87 // pred_fallthru
              _
          $region88: #{basenet_forward.1} parent=83 // pred_fallthru
            _
          %528 = vnop
        $region84: #{basenet_forward.1} parent=79 // pred_fallthru
          _
      $region80: #{basenet_forward.1} parent=5 // pred_fallthru
        _
      %p529 = scmp.le.s32.totalorder 1, %s28
      %p530 = scmp.lt.s32.totalorder %s28, 3
      %p531 = pnand %p529, %p530
      %p532 = pneg %p531
      // Predicated region
      $region119: #{basenet_forward.1} parent=5 // pred_check
        _
      $region120: #{basenet_forward.1} parent=5 // pred_check_branch
        %534 = sbr.rel (%p531) target = $region122
      $region121: #{basenet_forward.1} parent=5 // pred_region
        %s535 = ssub.s32 %s28, 1
        %s536 = sand.u32 %s41, 1
        %s537 = sand.u32 %s41, 1
        %s538 = smul.addr %s537, 16
        %s539 = scalar_lea.vmem [#allocation3], %s538
        // Predicated region
        $region123: #{basenet_forward.1} parent=121 // pred_check
          %p540 = pneg %p54
        $region124: #{basenet_forward.1} parent=121 // pred_check_branch
          %542 = sbr.rel (%p540) target = $region126
        $region125: #{basenet_forward.1} parent=121 // pred_region
          _
        $region126: #{basenet_forward.1} parent=121 // pred_fallthru
          _
        %s543 = sand.u32 %s41, 1
        %s544 = sand.u32 %s41, 1
        %s545 = smul.addr %s544, 16
        %s546 = scalar_lea.vmem [#allocation3], %s545
        %p547 = pneg %p54
        %p548 = pneg %p51
        %p549 = pneg %p75
        %p550 = pneg %p72
        %p551 = pneg %p96
        %p552 = pneg %p93
        %p553 = pneg %p117
        %p554 = pneg %p114
        %p555 = pneg %p138
        %p556 = pneg %p135
        %p557 = pneg %p159
        %p558 = pneg %p156
        %p559 = pneg %p180
        %p560 = pneg %p177
        %p561 = pneg %p201
        %p562 = pneg %p198
        %p563 = pneg %p222
        %p564 = pneg %p219
        %p565 = pneg %p243
        %p566 = pneg %p240
        %p567 = pneg %p264
        %p568 = pneg %p261
        %p569 = pneg %p285
        %p570 = pneg %p282
        %p571 = pneg %p306
        %p572 = pneg %p303
        %p573 = pneg %p327
        %p574 = pneg %p324
        %p575 = pneg %p348
        %p576 = pneg %p345
        %p577 = pneg %p369
        %p578 = pneg %p366
        %p579 = pneg %p390
        %p580 = pneg %p387
        %p581 = pneg %p416
        %p582 = pneg %p413
        %s583 = sand.u32 %s403, 1
        %s584 = scalar_lea.sflag [#allocation5], %s583
        %s585 = sand.u32 %s403, 1
        %s586 = smul.addr %s585, 2
        %s587 = scalar_lea.vmem [#allocation4], %s586
        %s588 = smul.u32 2, %s33
        %s589 = smul.u32 2, %s33
        %v591 = vld [vmem:[%s539] sm:$0xff]
        %v592 = vld [vmem:[%s539 + $0x8] sm:$0xff]
        %v593 = vld [vmem:[%s1] sm:$0xf]
        %v594 = vld [vmem:[%s1 + $0x4] sm:$0xf]
        %v595 = vld [vmem:[%s1 + $0x8] sm:$0xf]
        %v596 = vld [vmem:[%s1 + $0xc] sm:$0xf]
        %v597 = vld [vmem:[%s1 + $0x10] sm:$0xf]
        %v598 = vld [vmem:[%s1 + $0x14] sm:$0xf]
        %v599 = vld [vmem:[%s1 + $0x18] sm:$0xf]
        %v600 = vld [vmem:[%s1 + $0x1c] sm:$0xf]
        %v601 = vld [vmem:[%s2] sm:$0xff]
        %v602 = vld [vmem:[%s2 + $0x8] sm:$0xff]
        %v603 = vld [vmem:[%s2 + $0x10] sm:$0xff]
        %v604 = vld [vmem:[%s2 + $0x18] sm:$0xff]
        %v605 = vld [vmem:[%s2 + $0x20] sm:$0xff]
        %v606 = vld [vmem:[%s2 + $0x28] sm:$0xff]
        %v607 = vld [vmem:[%s2 + $0x30] sm:$0xff]
        %v608 = vld [vmem:[%s2 + $0x38] sm:$0xff]
        %610 = vset.pattern.permute.xlu0 0
        %611 = vperm.xlu0 %610, %v601
        %v612 = vpop.permute.xlu0 %611
        %615 = vset.pattern.permute.xlu0 0
        %616 = vperm.xlu0 %615, %v602
        %v617 = vpop.permute.xlu0 %616
        %620 = vset.pattern.permute.xlu0 0
        %621 = vperm.xlu0 %620, %v603
        %v622 = vpop.permute.xlu0 %621
        %625 = vset.pattern.permute.xlu0 0
        %626 = vperm.xlu0 %625, %v604
        %v627 = vpop.permute.xlu0 %626
        %630 = vset.pattern.permute.xlu0 0
        %631 = vperm.xlu0 %630, %v605
        %v632 = vpop.permute.xlu0 %631
        %635 = vset.pattern.permute.xlu0 0
        %636 = vperm.xlu0 %635, %v606
        %v637 = vpop.permute.xlu0 %636
        %640 = vset.pattern.permute.xlu0 0
        %641 = vperm.xlu0 %640, %v607
        %v642 = vpop.permute.xlu0 %641
        %645 = vset.pattern.permute.xlu0 0
        %646 = vperm.xlu0 %645, %v608
        %v647 = vpop.permute.xlu0 %646
        %v657 = vunpack.c.l.b16 %v593
        %v658 = vunpack.c.l.b16 %v594
        %v659 = vunpack.c.l.b16 %v595
        %v660 = vunpack.c.l.b16 %v596
        %v661 = vunpack.c.l.b16 %v597
        %v662 = vunpack.c.l.b16 %v598
        %v663 = vunpack.c.l.b16 %v599
        %v664 = vunpack.c.l.b16 %v600
        %v665 = vpack.c.b16 %v658, %v657
        %v666 = vpack.c.b16 %v660, %v659
        %v667 = vpack.c.b16 %v662, %v661
        %v668 = vpack.c.b16 %v664, %v663
        %v671 = vunpack.c.l.b16 %v591
        %v672 = vunpack.c.h.b16 %v591
        %v673 = vunpack.c.l.b16 %v592
        %v674 = vunpack.c.h.b16 %v592
        %v675 = vpack.c.b16 %v673, %v671
        %v676 = vpack.c.b16 %v674, %v672
        %vm679 = vcmask 130048
        %v681 = vsel %vm679, %v665, 0
        %v684 = vsel %vm679, %v666, 0
        %v687 = vsel %vm679, %v667, 0
        %v690 = vsel %vm679, %v668, 0
        %692 = vmatprep.subr.bf16.mxu0 %v676
        %693 = vmatpush1.bf16.msra.mxu0 %v675
        %694 = vmatprep.subr.bf16.mxu0 0
        %695 = vmatpush1.bf16.msra.mxu0 0
        %696 = vmatprep.subr.bf16.mxu0 0
        %697 = vmatpush1.bf16.msra.mxu0 0
        %698 = vmatprep.subr.bf16.mxu0 0
        %699 = vmatpush1.bf16.msra.mxu0 0
        %700 = vmatprep.subr.bf16.mxu0 0
        %701 = vmatpush1.bf16.msra.mxu0 0
        %702 = vmatprep.subr.bf16.mxu0 0
        %703 = vmatpush1.bf16.msra.mxu0 0
        %704 = vmatprep.subr.bf16.mxu0 0
        %705 = vmatpush1.bf16.msra.mxu0 0
        %706 = vmatprep.subr.bf16.mxu0 0
        %707 = vmatpush1.bf16.msra.mxu0 0
        %708 = vmatprep.subr.bf16.mxu0 0
        %709 = vmatpush1.bf16.msra.mxu0 0
        %710 = vmatprep.subr.bf16.mxu0 0
        %711 = vmatpush1.bf16.msra.mxu0 0
        %712 = vmatprep.subr.bf16.mxu0 0
        %713 = vmatpush1.bf16.msra.mxu0 0
        %714 = vmatprep.subr.bf16.mxu0 0
        %715 = vmatpush1.bf16.msra.mxu0 0
        %716 = vmatprep.subr.bf16.mxu0 0
        %717 = vmatpush1.bf16.msra.mxu0 0
        %718 = vmatprep.subr.bf16.mxu0 0
        %719 = vmatpush1.bf16.msra.mxu0 0
        %720 = vmatprep.subr.bf16.mxu0 0
        %721 = vmatpush1.bf16.msra.mxu0 0
        %722 = vmatprep.subr.bf16.mxu0 0
        %723 = vmatpush1.bf16.msra.mxu0 0
        %724 = vmatprep.mubr.bf16.mxu0 0
        %725 = vmatmul.mubr.bf16.gmra.mrb[0].mxu0 %v681
        %v726 = vpop.f32.mrb[0].mxu0
        %v727 = vadd.f32 %v612, %v726
        %v728 = vpop.f32.mrb[0].mxu0
        %v729 = vadd.f32 %v612, %v728
        %v730 = vpop.f32.mrb[0].mxu0
        %v731 = vadd.f32 %v617, %v730
        %v732 = vpop.f32.mrb[0].mxu0
        %v733 = vadd.f32 %v617, %v732
        %734 = vmatprep.mubr.bf16.mxu0 0
        %735 = vmatmul.mubr.bf16.gmra.mrb[0].mxu0 %v684
        %v736 = vpop.f32.mrb[0].mxu0
        %v737 = vadd.f32 %v622, %v736
        %v738 = vpop.f32.mrb[0].mxu0
        %v739 = vadd.f32 %v622, %v738
        %v740 = vpop.f32.mrb[0].mxu0
        %v741 = vadd.f32 %v627, %v740
        %v742 = vpop.f32.mrb[0].mxu0
        %v743 = vadd.f32 %v627, %v742
        %744 = vmatprep.mubr.bf16.mxu0 0
        %745 = vmatmul.mubr.bf16.gmra.mrb[0].mxu0 %v687
        %v746 = vpop.f32.mrb[0].mxu0
        %v747 = vadd.f32 %v632, %v746
        %v748 = vpop.f32.mrb[0].mxu0
        %v749 = vadd.f32 %v632, %v748
        %v750 = vpop.f32.mrb[0].mxu0
        %v751 = vadd.f32 %v637, %v750
        %v752 = vpop.f32.mrb[0].mxu0
        %v753 = vadd.f32 %v637, %v752
        %754 = vmatprep.mubr.bf16.mxu0 0
        %755 = vmatmul.mubr.bf16.gmra.mrb[0].mxu0 %v690
        %v756 = vpop.f32.mrb[0].mxu0
        %v757 = vadd.f32 %v642, %v756
        %v758 = vpop.f32.mrb[0].mxu0
        %v759 = vadd.f32 %v642, %v758
        %v760 = vpop.f32.mrb[0].mxu0
        %v761 = vadd.f32 %v647, %v760
        %v762 = vpop.f32.mrb[0].mxu0
        %v763 = vadd.f32 %v647, %v762
        %764 = vdwg.mxu0
        %v765 = vmul.f32 %v727, 0.5
        %v766 = vmul.f32 %v729, 0.5
        %v767 = vmul.f32 %v731, 0.5
        %v768 = vmul.f32 %v733, 0.5
        %v769 = vmul.f32 %v737, 0.5
        %v770 = vmul.f32 %v739, 0.5
        %v771 = vmul.f32 %v741, 0.5
        %v772 = vmul.f32 %v743, 0.5
        %v773 = vmul.f32 %v747, 0.5
        %v774 = vmul.f32 %v749, 0.5
        %v775 = vmul.f32 %v751, 0.5
        %v776 = vmul.f32 %v753, 0.5
        %v777 = vmul.f32 %v757, 0.5
        %v778 = vmul.f32 %v759, 0.5
        %v779 = vmul.f32 %v761, 0.5
        %v780 = vmul.f32 %v763, 0.5
        %v781 = vtanh.pop %v765
        %v782 = vtanh.pop %v766
        %v783 = vtanh.pop %v767
        %v784 = vtanh.pop %v768
        %v785 = vtanh.pop %v769
        %v786 = vtanh.pop %v770
        %v787 = vtanh.pop %v771
        %v788 = vtanh.pop %v772
        %v789 = vtanh.pop %v773
        %v790 = vtanh.pop %v774
        %v791 = vtanh.pop %v775
        %v792 = vtanh.pop %v776
        %v793 = vtanh.pop %v777
        %v794 = vtanh.pop %v778
        %v795 = vtanh.pop %v779
        %v796 = vtanh.pop %v780
        %v797 = vmul.f32 %v781, 0.5
        %v798 = vmul.f32 %v782, 0.5
        %v799 = vmul.f32 %v783, 0.5
        %v800 = vmul.f32 %v784, 0.5
        %v801 = vmul.f32 %v785, 0.5
        %v802 = vmul.f32 %v786, 0.5
        %v803 = vmul.f32 %v787, 0.5
        %v804 = vmul.f32 %v788, 0.5
        %v805 = vmul.f32 %v789, 0.5
        %v806 = vmul.f32 %v790, 0.5
        %v807 = vmul.f32 %v791, 0.5
        %v808 = vmul.f32 %v792, 0.5
        %v809 = vmul.f32 %v793, 0.5
        %v810 = vmul.f32 %v794, 0.5
        %v811 = vmul.f32 %v795, 0.5
        %v812 = vmul.f32 %v796, 0.5
        %v813 = vadd.f32 %v797, 0.5
        %v814 = vadd.f32 %v798, 0.5
        %v815 = vadd.f32 %v799, 0.5
        %v816 = vadd.f32 %v800, 0.5
        %v817 = vadd.f32 %v801, 0.5
        %v818 = vadd.f32 %v802, 0.5
        %v819 = vadd.f32 %v803, 0.5
        %v820 = vadd.f32 %v804, 0.5
        %v821 = vadd.f32 %v805, 0.5
        %v822 = vadd.f32 %v806, 0.5
        %v823 = vadd.f32 %v807, 0.5
        %v824 = vadd.f32 %v808, 0.5
        %v825 = vadd.f32 %v809, 0.5
        %v826 = vadd.f32 %v810, 0.5
        %v827 = vadd.f32 %v811, 0.5
        %v828 = vadd.f32 %v812, 0.5
        %v829 = vmul.f32 %v727, %v813
        %v830 = vmul.f32 %v729, %v814
        %v831 = vmul.f32 %v731, %v815
        %v832 = vmul.f32 %v733, %v816
        %v833 = vmul.f32 %v737, %v817
        %v834 = vmul.f32 %v739, %v818
        %v835 = vmul.f32 %v741, %v819
        %v836 = vmul.f32 %v743, %v820
        %v837 = vmul.f32 %v747, %v821
        %v838 = vmul.f32 %v749, %v822
        %v839 = vmul.f32 %v751, %v823
        %v840 = vmul.f32 %v753, %v824
        %v841 = vmul.f32 %v757, %v825
        %v842 = vmul.f32 %v759, %v826
        %v843 = vmul.f32 %v761, %v827
        %v844 = vmul.f32 %v763, %v828
        %v845 = vld [vmem:[%s3] sm:$0xf]
        %v846 = vld [vmem:[%s3 + $0x4] sm:$0xf]
        %v847 = vld [vmem:[%s3 + $0x8] sm:$0xf]
        %v848 = vld [vmem:[%s3 + $0xc] sm:$0xf]
        %v849 = vld [vmem:[%s3 + $0x10] sm:$0xf]
        %v850 = vld [vmem:[%s3 + $0x14] sm:$0xf]
        %v851 = vld [vmem:[%s3 + $0x18] sm:$0xf]
        %v852 = vld [vmem:[%s3 + $0x1c] sm:$0xf]
        %v853 = vpack.c.bf16 %v831, %v829
        %v854 = vpack.c.bf16 %v832, %v830
        %v855 = vpack.c.bf16 %v835, %v833
        %v856 = vpack.c.bf16 %v836, %v834
        %v857 = vpack.c.bf16 %v839, %v837
        %v858 = vpack.c.bf16 %v840, %v838
        %v859 = vpack.c.bf16 %v843, %v841
        %v860 = vpack.c.bf16 %v844, %v842
        %v861 = vld [vmem:[%s4] sm:$0xff]
        %v862 = vld [vmem:[%s4 + $0x8] sm:$0xff]
        %v863 = vld [vmem:[%s4 + $0x10] sm:$0xff]
        %v864 = vld [vmem:[%s4 + $0x18] sm:$0xff]
        %v865 = vld [vmem:[%s4 + $0x20] sm:$0xff]
        %v866 = vld [vmem:[%s4 + $0x28] sm:$0xff]
        %v867 = vld [vmem:[%s4 + $0x30] sm:$0xff]
        %v868 = vld [vmem:[%s4 + $0x38] sm:$0xff]
        %870 = vset.pattern.permute.xlu0 0
        %871 = vperm.xlu0 %870, %v861
        %v872 = vpop.permute.xlu0 %871
        %875 = vset.pattern.permute.xlu0 0
        %876 = vperm.xlu0 %875, %v862
        %v877 = vpop.permute.xlu0 %876
        %880 = vset.pattern.permute.xlu0 0
        %881 = vperm.xlu0 %880, %v863
        %v882 = vpop.permute.xlu0 %881
        %885 = vset.pattern.permute.xlu0 0
        %886 = vperm.xlu0 %885, %v864
        %v887 = vpop.permute.xlu0 %886
        %890 = vset.pattern.permute.xlu0 0
        %891 = vperm.xlu0 %890, %v865
        %v892 = vpop.permute.xlu0 %891
        %895 = vset.pattern.permute.xlu0 0
        %896 = vperm.xlu0 %895, %v866
        %v897 = vpop.permute.xlu0 %896
        %900 = vset.pattern.permute.xlu0 0
        %901 = vperm.xlu0 %900, %v867
        %v902 = vpop.permute.xlu0 %901
        %905 = vset.pattern.permute.xlu0 0
        %906 = vperm.xlu0 %905, %v868
        %v907 = vpop.permute.xlu0 %906
        %v917 = vunpack.c.l.b16 %v845
        %v918 = vunpack.c.l.b16 %v846
        %v919 = vunpack.c.l.b16 %v847
        %v920 = vunpack.c.l.b16 %v848
        %v921 = vunpack.c.l.b16 %v849
        %v922 = vunpack.c.l.b16 %v850
        %v923 = vunpack.c.l.b16 %v851
        %v924 = vunpack.c.l.b16 %v852
        %v925 = vpack.c.b16 %v918, %v917
        %v926 = vpack.c.b16 %v920, %v919
        %v927 = vpack.c.b16 %v922, %v921
        %v928 = vpack.c.b16 %v924, %v923
        %vm929 = vcmask 523264
        %v931 = vsel %vm929, %v925, 0
        %v934 = vsel %vm929, %v926, 0
        %v937 = vsel %vm929, %v927, 0
        %v940 = vsel %vm929, %v928, 0
        %942 = vmatprep.subr.bf16.mxu0 %v854
        %943 = vmatpush1.bf16.msra.mxu0 %v853
        %944 = vmatprep.subr.bf16.mxu0 %v856
        %945 = vmatpush1.bf16.msra.mxu0 %v855
        %946 = vmatprep.subr.bf16.mxu0 %v858
        %947 = vmatpush1.bf16.msra.mxu0 %v857
        %948 = vmatprep.subr.bf16.mxu0 %v860
        %949 = vmatpush1.bf16.msra.mxu0 %v859
        %950 = vmatprep.subr.bf16.mxu0 0
        %951 = vmatpush1.bf16.msra.mxu0 0
        %952 = vmatprep.subr.bf16.mxu0 0
        %953 = vmatpush1.bf16.msra.mxu0 0
        %954 = vmatprep.subr.bf16.mxu0 0
        %955 = vmatpush1.bf16.msra.mxu0 0
        %956 = vmatprep.subr.bf16.mxu0 0
        %957 = vmatpush1.bf16.msra.mxu0 0
        %958 = vmatprep.subr.bf16.mxu0 0
        %959 = vmatpush1.bf16.msra.mxu0 0
        %960 = vmatprep.subr.bf16.mxu0 0
        %961 = vmatpush1.bf16.msra.mxu0 0
        %962 = vmatprep.subr.bf16.mxu0 0
        %963 = vmatpush1.bf16.msra.mxu0 0
        %964 = vmatprep.subr.bf16.mxu0 0
        %965 = vmatpush1.bf16.msra.mxu0 0
        %966 = vmatprep.subr.bf16.mxu0 0
        %967 = vmatpush1.bf16.msra.mxu0 0
        %968 = vmatprep.subr.bf16.mxu0 0
        %969 = vmatpush1.bf16.msra.mxu0 0
        %970 = vmatprep.subr.bf16.mxu0 0
        %971 = vmatpush1.bf16.msra.mxu0 0
        %972 = vmatprep.subr.bf16.mxu0 0
        %973 = vmatpush1.bf16.msra.mxu0 0
        %974 = vmatprep.mubr.bf16.mxu0 0
        %975 = vmatmul.mubr.bf16.gmra.mrb[0].mxu0 %v931
        %v976 = vpop.f32.mrb[0].mxu0
        %v977 = vadd.f32 %v872, %v976
        %v978 = vpop.f32.mrb[0].mxu0
        %v979 = vadd.f32 %v872, %v978
        %v980 = vpop.f32.mrb[0].mxu0
        %v981 = vadd.f32 %v877, %v980
        %v982 = vpop.f32.mrb[0].mxu0
        %v983 = vadd.f32 %v877, %v982
        %984 = vmatprep.mubr.bf16.mxu0 0
        %985 = vmatmul.mubr.bf16.gmra.mrb[0].mxu0 %v934
        %v986 = vpop.f32.mrb[0].mxu0
        %v987 = vadd.f32 %v882, %v986
        %v988 = vpop.f32.mrb[0].mxu0
        %v989 = vadd.f32 %v882, %v988
        %v990 = vpop.f32.mrb[0].mxu0
        %v991 = vadd.f32 %v887, %v990
        %v992 = vpop.f32.mrb[0].mxu0
        %v993 = vadd.f32 %v887, %v992
        %994 = vmatprep.mubr.bf16.mxu0 0
        %995 = vmatmul.mubr.bf16.gmra.mrb[0].mxu0 %v937
        %v996 = vpop.f32.mrb[0].mxu0
        %v997 = vadd.f32 %v892, %v996
        %v998 = vpop.f32.mrb[0].mxu0
        %v999 = vadd.f32 %v892, %v998
        %v1000 = vpop.f32.mrb[0].mxu0
        %v1001 = vadd.f32 %v897, %v1000
        %v1002 = vpop.f32.mrb[0].mxu0
        %v1003 = vadd.f32 %v897, %v1002
        %1004 = vmatprep.mubr.bf16.mxu0 0
        %1005 = vmatmul.mubr.bf16.gmra.mrb[0].mxu0 %v940
        %v1006 = vpop.f32.mrb[0].mxu0
        %v1007 = vadd.f32 %v902, %v1006
        %v1008 = vpop.f32.mrb[0].mxu0
        %v1009 = vadd.f32 %v902, %v1008
        %v1010 = vpop.f32.mrb[0].mxu0
        %v1011 = vadd.f32 %v907, %v1010
        %v1012 = vpop.f32.mrb[0].mxu0
        %v1013 = vadd.f32 %v907, %v1012
        %1014 = vdwg.mxu0
        %v1015 = vmul.f32 %v977, 0.5
        %v1016 = vmul.f32 %v979, 0.5
        %v1017 = vmul.f32 %v981, 0.5
        %v1018 = vmul.f32 %v983, 0.5
        %v1019 = vmul.f32 %v987, 0.5
        %v1020 = vmul.f32 %v989, 0.5
        %v1021 = vmul.f32 %v991, 0.5
        %v1022 = vmul.f32 %v993, 0.5
        %v1023 = vmul.f32 %v997, 0.5
        %v1024 = vmul.f32 %v999, 0.5
        %v1025 = vmul.f32 %v1001, 0.5
        %v1026 = vmul.f32 %v1003, 0.5
        %v1027 = vmul.f32 %v1007, 0.5
        %v1028 = vmul.f32 %v1009, 0.5
        %v1029 = vmul.f32 %v1011, 0.5
        %v1030 = vmul.f32 %v1013, 0.5
        %v1031 = vtanh.pop %v1015
        %v1032 = vtanh.pop %v1016
        %v1033 = vtanh.pop %v1017
        %v1034 = vtanh.pop %v1018
        %v1035 = vtanh.pop %v1019
        %v1036 = vtanh.pop %v1020
        %v1037 = vtanh.pop %v1021
        %v1038 = vtanh.pop %v1022
        %v1039 = vtanh.pop %v1023
        %v1040 = vtanh.pop %v1024
        %v1041 = vtanh.pop %v1025
        %v1042 = vtanh.pop %v1026
        %v1043 = vtanh.pop %v1027
        %v1044 = vtanh.pop %v1028
        %v1045 = vtanh.pop %v1029
        %v1046 = vtanh.pop %v1030
        %v1047 = vmul.f32 %v1031, 0.5
        %v1048 = vmul.f32 %v1032, 0.5
        %v1049 = vmul.f32 %v1033, 0.5
        %v1050 = vmul.f32 %v1034, 0.5
        %v1051 = vmul.f32 %v1035, 0.5
        %v1052 = vmul.f32 %v1036, 0.5
        %v1053 = vmul.f32 %v1037, 0.5
        %v1054 = vmul.f32 %v1038, 0.5
        %v1055 = vmul.f32 %v1039, 0.5
        %v1056 = vmul.f32 %v1040, 0.5
        %v1057 = vmul.f32 %v1041, 0.5
        %v1058 = vmul.f32 %v1042, 0.5
        %v1059 = vmul.f32 %v1043, 0.5
        %v1060 = vmul.f32 %v1044, 0.5
        %v1061 = vmul.f32 %v1045, 0.5
        %v1062 = vmul.f32 %v1046, 0.5
        %v1063 = vadd.f32 %v1047, 0.5
        %v1064 = vadd.f32 %v1048, 0.5
        %v1065 = vadd.f32 %v1049, 0.5
        %v1066 = vadd.f32 %v1050, 0.5
        %v1067 = vadd.f32 %v1051, 0.5
        %v1068 = vadd.f32 %v1052, 0.5
        %v1069 = vadd.f32 %v1053, 0.5
        %v1070 = vadd.f32 %v1054, 0.5
        %v1071 = vadd.f32 %v1055, 0.5
        %v1072 = vadd.f32 %v1056, 0.5
        %v1073 = vadd.f32 %v1057, 0.5
        %v1074 = vadd.f32 %v1058, 0.5
        %v1075 = vadd.f32 %v1059, 0.5
        %v1076 = vadd.f32 %v1060, 0.5
        %v1077 = vadd.f32 %v1061, 0.5
        %v1078 = vadd.f32 %v1062, 0.5
        %v1079 = vmul.f32 %v977, %v1063
        %v1080 = vmul.f32 %v979, %v1064
        %v1081 = vmul.f32 %v981, %v1065
        %v1082 = vmul.f32 %v983, %v1066
        %v1083 = vmul.f32 %v987, %v1067
        %v1084 = vmul.f32 %v989, %v1068
        %v1085 = vmul.f32 %v991, %v1069
        %v1086 = vmul.f32 %v993, %v1070
        %v1087 = vmul.f32 %v997, %v1071
        %v1088 = vmul.f32 %v999, %v1072
        %v1089 = vmul.f32 %v1001, %v1073
        %v1090 = vmul.f32 %v1003, %v1074
        %v1091 = vmul.f32 %v1007, %v1075
        %v1092 = vmul.f32 %v1009, %v1076
        %v1093 = vmul.f32 %v1011, %v1077
        %v1094 = vmul.f32 %v1013, %v1078
        %v1095 = vld [vmem:[%s5] sm:$0xf]
        %v1096 = vld [vmem:[%s5 + $0x4] sm:$0xf]
        %v1097 = vld [vmem:[%s5 + $0x8] sm:$0xf]
        %v1098 = vld [vmem:[%s5 + $0xc] sm:$0xf]
        %v1099 = vld [vmem:[%s5 + $0x10] sm:$0xf]
        %v1100 = vld [vmem:[%s5 + $0x14] sm:$0xf]
        %v1101 = vld [vmem:[%s5 + $0x18] sm:$0xf]
        %v1102 = vld [vmem:[%s5 + $0x1c] sm:$0xf]
        %v1103 = vpack.c.bf16 %v1081, %v1079
        %v1104 = vpack.c.bf16 %v1082, %v1080
        %v1105 = vpack.c.bf16 %v1085, %v1083
        %v1106 = vpack.c.bf16 %v1086, %v1084
        %v1107 = vpack.c.bf16 %v1089, %v1087
        %v1108 = vpack.c.bf16 %v1090, %v1088
        %v1109 = vpack.c.bf16 %v1093, %v1091
        %v1110 = vpack.c.bf16 %v1094, %v1092
        %v1111 = vld [vmem:[%s6] sm:$0xff]
        %v1112 = vld [vmem:[%s6 + $0x8] sm:$0xff]
        %v1113 = vld [vmem:[%s6 + $0x10] sm:$0xff]
        %v1114 = vld [vmem:[%s6 + $0x18] sm:$0xff]
        %v1115 = vld [vmem:[%s6 + $0x20] sm:$0xff]
        %v1116 = vld [vmem:[%s6 + $0x28] sm:$0xff]
        %v1117 = vld [vmem:[%s6 + $0x30] sm:$0xff]
        %v1118 = vld [vmem:[%s6 + $0x38] sm:$0xff]
        %1120 = vset.pattern.permute.xlu0 0
        %1121 = vperm.xlu0 %1120, %v1111
        %v1122 = vpop.permute.xlu0 %1121
        %1125 = vset.pattern.permute.xlu0 0
        %1126 = vperm.xlu0 %1125, %v1112
        %v1127 = vpop.permute.xlu0 %1126
        %1130 = vset.pattern.permute.xlu0 0
        %1131 = vperm.xlu0 %1130, %v1113
        %v1132 = vpop.permute.xlu0 %1131
        %1135 = vset.pattern.permute.xlu0 0
        %1136 = vperm.xlu0 %1135, %v1114
        %v1137 = vpop.permute.xlu0 %1136
        %1140 = vset.pattern.permute.xlu0 0
        %1141 = vperm.xlu0 %1140, %v1115
        %v1142 = vpop.permute.xlu0 %1141
        %1145 = vset.pattern.permute.xlu0 0
        %1146 = vperm.xlu0 %1145, %v1116
        %v1147 = vpop.permute.xlu0 %1146
        %1150 = vset.pattern.permute.xlu0 0
        %1151 = vperm.xlu0 %1150, %v1117
        %v1152 = vpop.permute.xlu0 %1151
        %1155 = vset.pattern.permute.xlu0 0
        %1156 = vperm.xlu0 %1155, %v1118
        %v1157 = vpop.permute.xlu0 %1156
        %v1167 = vunpack.c.l.b16 %v1095
        %v1168 = vunpack.c.l.b16 %v1096
        %v1169 = vunpack.c.l.b16 %v1097
        %v1170 = vunpack.c.l.b16 %v1098
        %v1171 = vunpack.c.l.b16 %v1099
        %v1172 = vunpack.c.l.b16 %v1100
        %v1173 = vunpack.c.l.b16 %v1101
        %v1174 = vunpack.c.l.b16 %v1102
        %v1175 = vpack.c.b16 %v1168, %v1167
        %v1176 = vpack.c.b16 %v1170, %v1169
        %v1177 = vpack.c.b16 %v1172, %v1171
        %v1178 = vpack.c.b16 %v1174, %v1173
        %v1180 = vsel %vm929, %v1175, 0
        %v1183 = vsel %vm929, %v1176, 0
        %v1186 = vsel %vm929, %v1177, 0
        %v1189 = vsel %vm929, %v1178, 0
        %1191 = vmatprep.subr.bf16.mxu0 %v1104
        %1192 = vmatpush1.bf16.msra.mxu0 %v1103
        %1193 = vmatprep.subr.bf16.mxu0 %v1106
        %1194 = vmatpush1.bf16.msra.mxu0 %v1105
        %1195 = vmatprep.subr.bf16.mxu0 %v1108
        %1196 = vmatpush1.bf16.msra.mxu0 %v1107
        %1197 = vmatprep.subr.bf16.mxu0 %v1110
        %1198 = vmatpush1.bf16.msra.mxu0 %v1109
        %1199 = vmatprep.subr.bf16.mxu0 0
        %1200 = vmatpush1.bf16.msra.mxu0 0
        %1201 = vmatprep.subr.bf16.mxu0 0
        %1202 = vmatpush1.bf16.msra.mxu0 0
        %1203 = vmatprep.subr.bf16.mxu0 0
        %1204 = vmatpush1.bf16.msra.mxu0 0
        %1205 = vmatprep.subr.bf16.mxu0 0
        %1206 = vmatpush1.bf16.msra.mxu0 0
        %1207 = vmatprep.subr.bf16.mxu0 0
        %1208 = vmatpush1.bf16.msra.mxu0 0
        %1209 = vmatprep.subr.bf16.mxu0 0
        %1210 = vmatpush1.bf16.msra.mxu0 0
        %1211 = vmatprep.subr.bf16.mxu0 0
        %1212 = vmatpush1.bf16.msra.mxu0 0
        %1213 = vmatprep.subr.bf16.mxu0 0
        %1214 = vmatpush1.bf16.msra.mxu0 0
        %1215 = vmatprep.subr.bf16.mxu0 0
        %1216 = vmatpush1.bf16.msra.mxu0 0
        %1217 = vmatprep.subr.bf16.mxu0 0
        %1218 = vmatpush1.bf16.msra.mxu0 0
        %1219 = vmatprep.subr.bf16.mxu0 0
        %1220 = vmatpush1.bf16.msra.mxu0 0
        %1221 = vmatprep.subr.bf16.mxu0 0
        %1222 = vmatpush1.bf16.msra.mxu0 0
        %1223 = vmatprep.mubr.bf16.mxu0 0
        %1224 = vmatmul.mubr.bf16.gmra.mrb[0].mxu0 %v1180
        %v1225 = vpop.f32.mrb[0].mxu0
        %v1226 = vadd.f32 %v1122, %v1225
        %v1227 = vpop.f32.mrb[0].mxu0
        %v1228 = vadd.f32 %v1122, %v1227
        %v1229 = vpop.f32.mrb[0].mxu0
        %v1230 = vadd.f32 %v1127, %v1229
        %v1231 = vpop.f32.mrb[0].mxu0
        %v1232 = vadd.f32 %v1127, %v1231
        %1233 = vmatprep.mubr.bf16.mxu0 0
        %1234 = vmatmul.mubr.bf16.gmra.mrb[0].mxu0 %v1183
        %v1235 = vpop.f32.mrb[0].mxu0
        %v1236 = vadd.f32 %v1132, %v1235
        %v1237 = vpop.f32.mrb[0].mxu0
        %v1238 = vadd.f32 %v1132, %v1237
        %v1239 = vpop.f32.mrb[0].mxu0
        %v1240 = vadd.f32 %v1137, %v1239
        %v1241 = vpop.f32.mrb[0].mxu0
        %v1242 = vadd.f32 %v1137, %v1241
        %1243 = vmatprep.mubr.bf16.mxu0 0
        %1244 = vmatmul.mubr.bf16.gmra.mrb[0].mxu0 %v1186
        %v1245 = vpop.f32.mrb[0].mxu0
        %v1246 = vadd.f32 %v1142, %v1245
        %v1247 = vpop.f32.mrb[0].mxu0
        %v1248 = vadd.f32 %v1142, %v1247
        %v1249 = vpop.f32.mrb[0].mxu0
        %v1250 = vadd.f32 %v1147, %v1249
        %v1251 = vpop.f32.mrb[0].mxu0
        %v1252 = vadd.f32 %v1147, %v1251
        %1253 = vmatprep.mubr.bf16.mxu0 0
        %1254 = vmatmul.mubr.bf16.gmra.mrb[0].mxu0 %v1189
        %v1255 = vpop.f32.mrb[0].mxu0
        %v1256 = vadd.f32 %v1152, %v1255
        %v1257 = vpop.f32.mrb[0].mxu0
        %v1258 = vadd.f32 %v1152, %v1257
        %v1259 = vpop.f32.mrb[0].mxu0
        %v1260 = vadd.f32 %v1157, %v1259
        %v1261 = vpop.f32.mrb[0].mxu0
        %v1262 = vadd.f32 %v1157, %v1261
        %1263 = vdwg.mxu0
        %v1264 = vadd.f32 %v829, %v1226
        %v1265 = vadd.f32 %v830, %v1228
        %v1266 = vadd.f32 %v831, %v1230
        %v1267 = vadd.f32 %v832, %v1232
        %v1268 = vadd.f32 %v833, %v1236
        %v1269 = vadd.f32 %v834, %v1238
        %v1270 = vadd.f32 %v835, %v1240
        %v1271 = vadd.f32 %v836, %v1242
        %v1272 = vadd.f32 %v837, %v1246
        %v1273 = vadd.f32 %v838, %v1248
        %v1274 = vadd.f32 %v839, %v1250
        %v1275 = vadd.f32 %v840, %v1252
        %v1276 = vadd.f32 %v841, %v1256
        %v1277 = vadd.f32 %v842, %v1258
        %v1278 = vadd.f32 %v843, %v1260
        %v1279 = vadd.f32 %v844, %v1262
        %v1280 = vmul.f32 %v1264, 0.5
        %v1281 = vmul.f32 %v1265, 0.5
        %v1282 = vmul.f32 %v1266, 0.5
        %v1283 = vmul.f32 %v1267, 0.5
        %v1284 = vmul.f32 %v1268, 0.5
        %v1285 = vmul.f32 %v1269, 0.5
        %v1286 = vmul.f32 %v1270, 0.5
        %v1287 = vmul.f32 %v1271, 0.5
        %v1288 = vmul.f32 %v1272, 0.5
        %v1289 = vmul.f32 %v1273, 0.5
        %v1290 = vmul.f32 %v1274, 0.5
        %v1291 = vmul.f32 %v1275, 0.5
        %v1292 = vmul.f32 %v1276, 0.5
        %v1293 = vmul.f32 %v1277, 0.5
        %v1294 = vmul.f32 %v1278, 0.5
        %v1295 = vmul.f32 %v1279, 0.5
        %v1296 = vtanh.pop %v1280
        %v1297 = vtanh.pop %v1281
        %v1298 = vtanh.pop %v1282
        %v1299 = vtanh.pop %v1283
        %v1300 = vtanh.pop %v1284
        %v1301 = vtanh.pop %v1285
        %v1302 = vtanh.pop %v1286
        %v1303 = vtanh.pop %v1287
        %v1304 = vtanh.pop %v1288
        %v1305 = vtanh.pop %v1289
        %v1306 = vtanh.pop %v1290
        %v1307 = vtanh.pop %v1291
        %v1308 = vtanh.pop %v1292
        %v1309 = vtanh.pop %v1293
        %v1310 = vtanh.pop %v1294
        %v1311 = vtanh.pop %v1295
        %v1312 = vmul.f32 %v1296, 0.5
        %v1313 = vmul.f32 %v1297, 0.5
        %v1314 = vmul.f32 %v1298, 0.5
        %v1315 = vmul.f32 %v1299, 0.5
        %v1316 = vmul.f32 %v1300, 0.5
        %v1317 = vmul.f32 %v1301, 0.5
        %v1318 = vmul.f32 %v1302, 0.5
        %v1319 = vmul.f32 %v1303, 0.5
        %v1320 = vmul.f32 %v1304, 0.5
        %v1321 = vmul.f32 %v1305, 0.5
        %v1322 = vmul.f32 %v1306, 0.5
        %v1323 = vmul.f32 %v1307, 0.5
        %v1324 = vmul.f32 %v1308, 0.5
        %v1325 = vmul.f32 %v1309, 0.5
        %v1326 = vmul.f32 %v1310, 0.5
        %v1327 = vmul.f32 %v1311, 0.5
        %v1328 = vadd.f32 %v1312, 0.5
        %v1329 = vadd.f32 %v1313, 0.5
        %v1330 = vadd.f32 %v1314, 0.5
        %v1331 = vadd.f32 %v1315, 0.5
        %v1332 = vadd.f32 %v1316, 0.5
        %v1333 = vadd.f32 %v1317, 0.5
        %v1334 = vadd.f32 %v1318, 0.5
        %v1335 = vadd.f32 %v1319, 0.5
        %v1336 = vadd.f32 %v1320, 0.5
        %v1337 = vadd.f32 %v1321, 0.5
        %v1338 = vadd.f32 %v1322, 0.5
        %v1339 = vadd.f32 %v1323, 0.5
        %v1340 = vadd.f32 %v1324, 0.5
        %v1341 = vadd.f32 %v1325, 0.5
        %v1342 = vadd.f32 %v1326, 0.5
        %v1343 = vadd.f32 %v1327, 0.5
        %v1344 = vmul.f32 %v1264, %v1328
        %v1345 = vmul.f32 %v1265, %v1329
        %v1346 = vmul.f32 %v1266, %v1330
        %v1347 = vmul.f32 %v1267, %v1331
        %v1348 = vmul.f32 %v1268, %v1332
        %v1349 = vmul.f32 %v1269, %v1333
        %v1350 = vmul.f32 %v1270, %v1334
        %v1351 = vmul.f32 %v1271, %v1335
        %v1352 = vmul.f32 %v1272, %v1336
        %v1353 = vmul.f32 %v1273, %v1337
        %v1354 = vmul.f32 %v1274, %v1338
        %v1355 = vmul.f32 %v1275, %v1339
        %v1356 = vmul.f32 %v1276, %v1340
        %v1357 = vmul.f32 %v1277, %v1341
        %v1358 = vmul.f32 %v1278, %v1342
        %v1359 = vmul.f32 %v1279, %v1343
        %v1360 = vld [vmem:[%s7] sm:$0xf]
        %v1361 = vld [vmem:[%s7 + $0x4] sm:$0xf]
        %v1362 = vld [vmem:[%s7 + $0x8] sm:$0xf]
        %v1363 = vld [vmem:[%s7 + $0xc] sm:$0xf]
        %v1364 = vld [vmem:[%s7 + $0x10] sm:$0xf]
        %v1365 = vld [vmem:[%s7 + $0x14] sm:$0xf]
        %v1366 = vld [vmem:[%s7 + $0x18] sm:$0xf]
        %v1367 = vld [vmem:[%s7 + $0x1c] sm:$0xf]
        %v1368 = vpack.c.bf16 %v1346, %v1344
        %v1369 = vpack.c.bf16 %v1347, %v1345
        %v1370 = vpack.c.bf16 %v1350, %v1348
        %v1371 = vpack.c.bf16 %v1351, %v1349
        %v1372 = vpack.c.bf16 %v1354, %v1352
        %v1373 = vpack.c.bf16 %v1355, %v1353
        %v1374 = vpack.c.bf16 %v1358, %v1356
        %v1375 = vpack.c.bf16 %v1359, %v1357
        %v1376 = vld [vmem:[%s8] sm:$0xff]
        %v1377 = vld [vmem:[%s8 + $0x8] sm:$0xff]
        %v1378 = vld [vmem:[%s8 + $0x10] sm:$0xff]
        %v1379 = vld [vmem:[%s8 + $0x18] sm:$0xff]
        %v1380 = vld [vmem:[%s8 + $0x20] sm:$0xff]
        %v1381 = vld [vmem:[%s8 + $0x28] sm:$0xff]
        %v1382 = vld [vmem:[%s8 + $0x30] sm:$0xff]
        %v1383 = vld [vmem:[%s8 + $0x38] sm:$0xff]
        %1385 = vset.pattern.permute.xlu0 0
        %1386 = vperm.xlu0 %1385, %v1376
        %v1387 = vpop.permute.xlu0 %1386
        %1390 = vset.pattern.permute.xlu0 0
        %1391 = vperm.xlu0 %1390, %v1377
        %v1392 = vpop.permute.xlu0 %1391
        %1395 = vset.pattern.permute.xlu0 0
        %1396 = vperm.xlu0 %1395, %v1378
        %v1397 = vpop.permute.xlu0 %1396
        %1400 = vset.pattern.permute.xlu0 0
        %1401 = vperm.xlu0 %1400, %v1379
        %v1402 = vpop.permute.xlu0 %1401
        %1405 = vset.pattern.permute.xlu0 0
        %1406 = vperm.xlu0 %1405, %v1380
        %v1407 = vpop.permute.xlu0 %1406
        %1410 = vset.pattern.permute.xlu0 0
        %1411 = vperm.xlu0 %1410, %v1381
        %v1412 = vpop.permute.xlu0 %1411
        %1415 = vset.pattern.permute.xlu0 0
        %1416 = vperm.xlu0 %1415, %v1382
        %v1417 = vpop.permute.xlu0 %1416
        %1420 = vset.pattern.permute.xlu0 0
        %1421 = vperm.xlu0 %1420, %v1383
        %v1422 = vpop.permute.xlu0 %1421
        %v1432 = vunpack.c.l.b16 %v1360
        %v1433 = vunpack.c.l.b16 %v1361
        %v1434 = vunpack.c.l.b16 %v1362
        %v1435 = vunpack.c.l.b16 %v1363
        %v1436 = vunpack.c.l.b16 %v1364
        %v1437 = vunpack.c.l.b16 %v1365
        %v1438 = vunpack.c.l.b16 %v1366
        %v1439 = vunpack.c.l.b16 %v1367
        %v1440 = vpack.c.b16 %v1433, %v1432
        %v1441 = vpack.c.b16 %v1435, %v1434
        %v1442 = vpack.c.b16 %v1437, %v1436
        %v1443 = vpack.c.b16 %v1439, %v1438
        %v1445 = vsel %vm929, %v1440, 0
        %v1448 = vsel %vm929, %v1441, 0
        %v1451 = vsel %vm929, %v1442, 0
        %v1454 = vsel %vm929, %v1443, 0
        %1456 = vmatprep.subr.bf16.mxu0 %v1369
        %1457 = vmatpush1.bf16.msra.mxu0 %v1368
        %1458 = vmatprep.subr.bf16.mxu0 %v1371
        %1459 = vmatpush1.bf16.msra.mxu0 %v1370
        %1460 = vmatprep.subr.bf16.mxu0 %v1373
        %1461 = vmatpush1.bf16.msra.mxu0 %v1372
        %1462 = vmatprep.subr.bf16.mxu0 %v1375
        %1463 = vmatpush1.bf16.msra.mxu0 %v1374
        %1464 = vmatprep.subr.bf16.mxu0 0
        %1465 = vmatpush1.bf16.msra.mxu0 0
        %1466 = vmatprep.subr.bf16.mxu0 0
        %1467 = vmatpush1.bf16.msra.mxu0 0
        %1468 = vmatprep.subr.bf16.mxu0 0
        %1469 = vmatpush1.bf16.msra.mxu0 0
        %1470 = vmatprep.subr.bf16.mxu0 0
        %1471 = vmatpush1.bf16.msra.mxu0 0
        %1472 = vmatprep.subr.bf16.mxu0 0
        %1473 = vmatpush1.bf16.msra.mxu0 0
        %1474 = vmatprep.subr.bf16.mxu0 0
        %1475 = vmatpush1.bf16.msra.mxu0 0
        %1476 = vmatprep.subr.bf16.mxu0 0
        %1477 = vmatpush1.bf16.msra.mxu0 0
        %1478 = vmatprep.subr.bf16.mxu0 0
        %1479 = vmatpush1.bf16.msra.mxu0 0
        %1480 = vmatprep.subr.bf16.mxu0 0
        %1481 = vmatpush1.bf16.msra.mxu0 0
        %1482 = vmatprep.subr.bf16.mxu0 0
        %1483 = vmatpush1.bf16.msra.mxu0 0
        %1484 = vmatprep.subr.bf16.mxu0 0
        %1485 = vmatpush1.bf16.msra.mxu0 0
        %1486 = vmatprep.subr.bf16.mxu0 0
        %1487 = vmatpush1.bf16.msra.mxu0 0
        %1488 = vmatprep.mubr.bf16.mxu0 0
        %1489 = vmatmul.mubr.bf16.gmra.mrb[0].mxu0 %v1445
        %v1490 = vpop.f32.mrb[0].mxu0
        %v1491 = vadd.f32 %v1387, %v1490
        %v1492 = vpop.f32.mrb[0].mxu0
        %v1493 = vadd.f32 %v1387, %v1492
        %v1494 = vpop.f32.mrb[0].mxu0
        %v1495 = vadd.f32 %v1392, %v1494
        %v1496 = vpop.f32.mrb[0].mxu0
        %v1497 = vadd.f32 %v1392, %v1496
        %1498 = vmatprep.mubr.bf16.mxu0 0
        %1499 = vmatmul.mubr.bf16.gmra.mrb[0].mxu0 %v1448
        %v1500 = vpop.f32.mrb[0].mxu0
        %v1501 = vadd.f32 %v1397, %v1500
        %v1502 = vpop.f32.mrb[0].mxu0
        %v1503 = vadd.f32 %v1397, %v1502
        %v1504 = vpop.f32.mrb[0].mxu0
        %v1505 = vadd.f32 %v1402, %v1504
        %v1506 = vpop.f32.mrb[0].mxu0
        %v1507 = vadd.f32 %v1402, %v1506
        %1508 = vmatprep.mubr.bf16.mxu0 0
        %1509 = vmatmul.mubr.bf16.gmra.mrb[0].mxu0 %v1451
        %v1510 = vpop.f32.mrb[0].mxu0
        %v1511 = vadd.f32 %v1407, %v1510
        %v1512 = vpop.f32.mrb[0].mxu0
        %v1513 = vadd.f32 %v1407, %v1512
        %v1514 = vpop.f32.mrb[0].mxu0
        %v1515 = vadd.f32 %v1412, %v1514
        %v1516 = vpop.f32.mrb[0].mxu0
        %v1517 = vadd.f32 %v1412, %v1516
        %1518 = vmatprep.mubr.bf16.mxu0 0
        %1519 = vmatmul.mubr.bf16.gmra.mrb[0].mxu0 %v1454
        %v1520 = vpop.f32.mrb[0].mxu0
        %v1521 = vadd.f32 %v1417, %v1520
        %v1522 = vpop.f32.mrb[0].mxu0
        %v1523 = vadd.f32 %v1417, %v1522
        %v1524 = vpop.f32.mrb[0].mxu0
        %v1525 = vadd.f32 %v1422, %v1524
        %v1526 = vpop.f32.mrb[0].mxu0
        %v1527 = vadd.f32 %v1422, %v1526
        %1528 = vdwg.mxu0
        %v1529 = vmul.f32 %v1491, 0.5
        %v1530 = vmul.f32 %v1493, 0.5
        %v1531 = vmul.f32 %v1495, 0.5
        %v1532 = vmul.f32 %v1497, 0.5
        %v1533 = vmul.f32 %v1501, 0.5
        %v1534 = vmul.f32 %v1503, 0.5
        %v1535 = vmul.f32 %v1505, 0.5
        %v1536 = vmul.f32 %v1507, 0.5
        %v1537 = vmul.f32 %v1511, 0.5
        %v1538 = vmul.f32 %v1513, 0.5
        %v1539 = vmul.f32 %v1515, 0.5
        %v1540 = vmul.f32 %v1517, 0.5
        %v1541 = vmul.f32 %v1521, 0.5
        %v1542 = vmul.f32 %v1523, 0.5
        %v1543 = vmul.f32 %v1525, 0.5
        %v1544 = vmul.f32 %v1527, 0.5
        %v1545 = vtanh.pop %v1529
        %v1546 = vtanh.pop %v1530
        %v1547 = vtanh.pop %v1531
        %v1548 = vtanh.pop %v1532
        %v1549 = vtanh.pop %v1533
        %v1550 = vtanh.pop %v1534
        %v1551 = vtanh.pop %v1535
        %v1552 = vtanh.pop %v1536
        %v1553 = vtanh.pop %v1537
        %v1554 = vtanh.pop %v1538
        %v1555 = vtanh.pop %v1539
        %v1556 = vtanh.pop %v1540
        %v1557 = vtanh.pop %v1541
        %v1558 = vtanh.pop %v1542
        %v1559 = vtanh.pop %v1543
        %v1560 = vtanh.pop %v1544
        %v1561 = vmul.f32 %v1545, 0.5
        %v1562 = vmul.f32 %v1546, 0.5
        %v1563 = vmul.f32 %v1547, 0.5
        %v1564 = vmul.f32 %v1548, 0.5
        %v1565 = vmul.f32 %v1549, 0.5
        %v1566 = vmul.f32 %v1550, 0.5
        %v1567 = vmul.f32 %v1551, 0.5
        %v1568 = vmul.f32 %v1552, 0.5
        %v1569 = vmul.f32 %v1553, 0.5
        %v1570 = vmul.f32 %v1554, 0.5
        %v1571 = vmul.f32 %v1555, 0.5
        %v1572 = vmul.f32 %v1556, 0.5
        %v1573 = vmul.f32 %v1557, 0.5
        %v1574 = vmul.f32 %v1558, 0.5
        %v1575 = vmul.f32 %v1559, 0.5
        %v1576 = vmul.f32 %v1560, 0.5
        %v1577 = vadd.f32 %v1561, 0.5
        %v1578 = vadd.f32 %v1562, 0.5
        %v1579 = vadd.f32 %v1563, 0.5
        %v1580 = vadd.f32 %v1564, 0.5
        %v1581 = vadd.f32 %v1565, 0.5
        %v1582 = vadd.f32 %v1566, 0.5
        %v1583 = vadd.f32 %v1567, 0.5
        %v1584 = vadd.f32 %v1568, 0.5
        %v1585 = vadd.f32 %v1569, 0.5
        %v1586 = vadd.f32 %v1570, 0.5
        %v1587 = vadd.f32 %v1571, 0.5
        %v1588 = vadd.f32 %v1572, 0.5
        %v1589 = vadd.f32 %v1573, 0.5
        %v1590 = vadd.f32 %v1574, 0.5
        %v1591 = vadd.f32 %v1575, 0.5
        %v1592 = vadd.f32 %v1576, 0.5
        %v1593 = vmul.f32 %v1491, %v1577
        %v1594 = vmul.f32 %v1493, %v1578
        %v1595 = vmul.f32 %v1495, %v1579
        %v1596 = vmul.f32 %v1497, %v1580
        %v1597 = vmul.f32 %v1501, %v1581
        %v1598 = vmul.f32 %v1503, %v1582
        %v1599 = vmul.f32 %v1505, %v1583
        %v1600 = vmul.f32 %v1507, %v1584
        %v1601 = vmul.f32 %v1511, %v1585
        %v1602 = vmul.f32 %v1513, %v1586
        %v1603 = vmul.f32 %v1515, %v1587
        %v1604 = vmul.f32 %v1517, %v1588
        %v1605 = vmul.f32 %v1521, %v1589
        %v1606 = vmul.f32 %v1523, %v1590
        %v1607 = vmul.f32 %v1525, %v1591
        %v1608 = vmul.f32 %v1527, %v1592
        %v1609 = vld [vmem:[%s9] sm:$0xf]
        %v1610 = vld [vmem:[%s9 + $0x4] sm:$0xf]
        %v1611 = vld [vmem:[%s9 + $0x8] sm:$0xf]
        %v1612 = vld [vmem:[%s9 + $0xc] sm:$0xf]
        %v1613 = vld [vmem:[%s9 + $0x10] sm:$0xf]
        %v1614 = vld [vmem:[%s9 + $0x14] sm:$0xf]
        %v1615 = vld [vmem:[%s9 + $0x18] sm:$0xf]
        %v1616 = vld [vmem:[%s9 + $0x1c] sm:$0xf]
        %v1617 = vpack.c.bf16 %v1595, %v1593
        %v1618 = vpack.c.bf16 %v1596, %v1594
        %v1619 = vpack.c.bf16 %v1599, %v1597
        %v1620 = vpack.c.bf16 %v1600, %v1598
        %v1621 = vpack.c.bf16 %v1603, %v1601
        %v1622 = vpack.c.bf16 %v1604, %v1602
        %v1623 = vpack.c.bf16 %v1607, %v1605
        %v1624 = vpack.c.bf16 %v1608, %v1606
        %v1625 = vld [vmem:[%s10] sm:$0xff]
        %v1626 = vld [vmem:[%s10 + $0x8] sm:$0xff]
        %v1627 = vld [vmem:[%s10 + $0x10] sm:$0xff]
        %v1628 = vld [vmem:[%s10 + $0x18] sm:$0xff]
        %v1629 = vld [vmem:[%s10 + $0x20] sm:$0xff]
        %v1630 = vld [vmem:[%s10 + $0x28] sm:$0xff]
        %v1631 = vld [vmem:[%s10 + $0x30] sm:$0xff]
        %v1632 = vld [vmem:[%s10 + $0x38] sm:$0xff]
        %1634 = vset.pattern.permute.xlu0 0
        %1635 = vperm.xlu0 %1634, %v1625
        %v1636 = vpop.permute.xlu0 %1635
        %1639 = vset.pattern.permute.xlu0 0
        %1640 = vperm.xlu0 %1639, %v1626
        %v1641 = vpop.permute.xlu0 %1640
        %1644 = vset.pattern.permute.xlu0 0
        %1645 = vperm.xlu0 %1644, %v1627
        %v1646 = vpop.permute.xlu0 %1645
        %1649 = vset.pattern.permute.xlu0 0
        %1650 = vperm.xlu0 %1649, %v1628
        %v1651 = vpop.permute.xlu0 %1650
        %1654 = vset.pattern.permute.xlu0 0
        %1655 = vperm.xlu0 %1654, %v1629
        %v1656 = vpop.permute.xlu0 %1655
        %1659 = vset.pattern.permute.xlu0 0
        %1660 = vperm.xlu0 %1659, %v1630
        %v1661 = vpop.permute.xlu0 %1660
        %1664 = vset.pattern.permute.xlu0 0
        %1665 = vperm.xlu0 %1664, %v1631
        %v1666 = vpop.permute.xlu0 %1665
        %1669 = vset.pattern.permute.xlu0 0
        %1670 = vperm.xlu0 %1669, %v1632
        %v1671 = vpop.permute.xlu0 %1670
        %v1681 = vunpack.c.l.b16 %v1609
        %v1682 = vunpack.c.l.b16 %v1610
        %v1683 = vunpack.c.l.b16 %v1611
        %v1684 = vunpack.c.l.b16 %v1612
        %v1685 = vunpack.c.l.b16 %v1613
        %v1686 = vunpack.c.l.b16 %v1614
        %v1687 = vunpack.c.l.b16 %v1615
        %v1688 = vunpack.c.l.b16 %v1616
        %v1689 = vpack.c.b16 %v1682, %v1681
        %v1690 = vpack.c.b16 %v1684, %v1683
        %v1691 = vpack.c.b16 %v1686, %v1685
        %v1692 = vpack.c.b16 %v1688, %v1687
        %v1694 = vsel %vm929, %v1689, 0
        %v1697 = vsel %vm929, %v1690, 0
        %v1700 = vsel %vm929, %v1691, 0
        %v1703 = vsel %vm929, %v1692, 0
        %1705 = vmatprep.subr.bf16.mxu0 %v1618
        %1706 = vmatpush1.bf16.msra.mxu0 %v1617
        %1707 = vmatprep.subr.bf16.mxu0 %v1620
        %1708 = vmatpush1.bf16.msra.mxu0 %v1619
        %1709 = vmatprep.subr.bf16.mxu0 %v1622
        %1710 = vmatpush1.bf16.msra.mxu0 %v1621
        %1711 = vmatprep.subr.bf16.mxu0 %v1624
        %1712 = vmatpush1.bf16.msra.mxu0 %v1623
        %1713 = vmatprep.subr.bf16.mxu0 0
        %1714 = vmatpush1.bf16.msra.mxu0 0
        %1715 = vmatprep.subr.bf16.mxu0 0
        %1716 = vmatpush1.bf16.msra.mxu0 0
        %1717 = vmatprep.subr.bf16.mxu0 0
        %1718 = vmatpush1.bf16.msra.mxu0 0
        %1719 = vmatprep.subr.bf16.mxu0 0
        %1720 = vmatpush1.bf16.msra.mxu0 0
        %1721 = vmatprep.subr.bf16.mxu0 0
        %1722 = vmatpush1.bf16.msra.mxu0 0
        %1723 = vmatprep.subr.bf16.mxu0 0
        %1724 = vmatpush1.bf16.msra.mxu0 0
        %1725 = vmatprep.subr.bf16.mxu0 0
        %1726 = vmatpush1.bf16.msra.mxu0 0
        %1727 = vmatprep.subr.bf16.mxu0 0
        %1728 = vmatpush1.bf16.msra.mxu0 0
        %1729 = vmatprep.subr.bf16.mxu0 0
        %1730 = vmatpush1.bf16.msra.mxu0 0
        %1731 = vmatprep.subr.bf16.mxu0 0
        %1732 = vmatpush1.bf16.msra.mxu0 0
        %1733 = vmatprep.subr.bf16.mxu0 0
        %1734 = vmatpush1.bf16.msra.mxu0 0
        %1735 = vmatprep.subr.bf16.mxu0 0
        %1736 = vmatpush1.bf16.msra.mxu0 0
        %1737 = vmatprep.mubr.bf16.mxu0 0
        %1738 = vmatmul.mubr.bf16.gmra.mrb[0].mxu0 %v1694
        %v1739 = vpop.f32.mrb[0].mxu0
        %v1740 = vadd.f32 %v1636, %v1739
        %v1741 = vpop.f32.mrb[0].mxu0
        %v1742 = vadd.f32 %v1636, %v1741
        %v1743 = vpop.f32.mrb[0].mxu0
        %v1744 = vadd.f32 %v1641, %v1743
        %v1745 = vpop.f32.mrb[0].mxu0
        %v1746 = vadd.f32 %v1641, %v1745
        %1747 = vmatprep.mubr.bf16.mxu0 0
        %1748 = vmatmul.mubr.bf16.gmra.mrb[0].mxu0 %v1697
        %v1749 = vpop.f32.mrb[0].mxu0
        %v1750 = vadd.f32 %v1646, %v1749
        %v1751 = vpop.f32.mrb[0].mxu0
        %v1752 = vadd.f32 %v1646, %v1751
        %v1753 = vpop.f32.mrb[0].mxu0
        %v1754 = vadd.f32 %v1651, %v1753
        %v1755 = vpop.f32.mrb[0].mxu0
        %v1756 = vadd.f32 %v1651, %v1755
        %1757 = vmatprep.mubr.bf16.mxu0 0
        %1758 = vmatmul.mubr.bf16.gmra.mrb[0].mxu0 %v1700
        %v1759 = vpop.f32.mrb[0].mxu0
        %v1760 = vadd.f32 %v1656, %v1759
        %v1761 = vpop.f32.mrb[0].mxu0
        %v1762 = vadd.f32 %v1656, %v1761
        %v1763 = vpop.f32.mrb[0].mxu0
        %v1764 = vadd.f32 %v1661, %v1763
        %v1765 = vpop.f32.mrb[0].mxu0
        %v1766 = vadd.f32 %v1661, %v1765
        %1767 = vmatprep.mubr.bf16.mxu0 0
        %1768 = vmatmul.mubr.bf16.gmra.mrb[0].mxu0 %v1703
        %v1769 = vpop.f32.mrb[0].mxu0
        %v1770 = vadd.f32 %v1666, %v1769
        %v1771 = vpop.f32.mrb[0].mxu0
        %v1772 = vadd.f32 %v1666, %v1771
        %v1773 = vpop.f32.mrb[0].mxu0
        %v1774 = vadd.f32 %v1671, %v1773
        %v1775 = vpop.f32.mrb[0].mxu0
        %v1776 = vadd.f32 %v1671, %v1775
        %1777 = vdwg.mxu0
        %v1778 = vadd.f32 %v1344, %v1740
        %v1779 = vadd.f32 %v1345, %v1742
        %v1780 = vadd.f32 %v1346, %v1744
        %v1781 = vadd.f32 %v1347, %v1746
        %v1782 = vadd.f32 %v1348, %v1750
        %v1783 = vadd.f32 %v1349, %v1752
        %v1784 = vadd.f32 %v1350, %v1754
        %v1785 = vadd.f32 %v1351, %v1756
        %v1786 = vadd.f32 %v1352, %v1760
        %v1787 = vadd.f32 %v1353, %v1762
        %v1788 = vadd.f32 %v1354, %v1764
        %v1789 = vadd.f32 %v1355, %v1766
        %v1790 = vadd.f32 %v1356, %v1770
        %v1791 = vadd.f32 %v1357, %v1772
        %v1792 = vadd.f32 %v1358, %v1774
        %v1793 = vadd.f32 %v1359, %v1776
        %v1794 = vmul.f32 %v1778, 0.5
        %v1795 = vmul.f32 %v1779, 0.5
        %v1796 = vmul.f32 %v1780, 0.5
        %v1797 = vmul.f32 %v1781, 0.5
        %v1798 = vmul.f32 %v1782, 0.5
        %v1799 = vmul.f32 %v1783, 0.5
        %v1800 = vmul.f32 %v1784, 0.5
        %v1801 = vmul.f32 %v1785, 0.5
        %v1802 = vmul.f32 %v1786, 0.5
        %v1803 = vmul.f32 %v1787, 0.5
        %v1804 = vmul.f32 %v1788, 0.5
        %v1805 = vmul.f32 %v1789, 0.5
        %v1806 = vmul.f32 %v1790, 0.5
        %v1807 = vmul.f32 %v1791, 0.5
        %v1808 = vmul.f32 %v1792, 0.5
        %v1809 = vmul.f32 %v1793, 0.5
        %v1810 = vtanh.pop %v1794
        %v1811 = vtanh.pop %v1795
        %v1812 = vtanh.pop %v1796
        %v1813 = vtanh.pop %v1797
        %v1814 = vtanh.pop %v1798
        %v1815 = vtanh.pop %v1799
        %v1816 = vtanh.pop %v1800
        %v1817 = vtanh.pop %v1801
        %v1818 = vtanh.pop %v1802
        %v1819 = vtanh.pop %v1803
        %v1820 = vtanh.pop %v1804
        %v1821 = vtanh.pop %v1805
        %v1822 = vtanh.pop %v1806
        %v1823 = vtanh.pop %v1807
        %v1824 = vtanh.pop %v1808
        %v1825 = vtanh.pop %v1809
        %v1826 = vmul.f32 %v1810, 0.5
        %v1827 = vmul.f32 %v1811, 0.5
        %v1828 = vmul.f32 %v1812, 0.5
        %v1829 = vmul.f32 %v1813, 0.5
        %v1830 = vmul.f32 %v1814, 0.5
        %v1831 = vmul.f32 %v1815, 0.5
        %v1832 = vmul.f32 %v1816, 0.5
        %v1833 = vmul.f32 %v1817, 0.5
        %v1834 = vmul.f32 %v1818, 0.5
        %v1835 = vmul.f32 %v1819, 0.5
        %v1836 = vmul.f32 %v1820, 0.5
        %v1837 = vmul.f32 %v1821, 0.5
        %v1838 = vmul.f32 %v1822, 0.5
        %v1839 = vmul.f32 %v1823, 0.5
        %v1840 = vmul.f32 %v1824, 0.5
        %v1841 = vmul.f32 %v1825, 0.5
        %v1842 = vadd.f32 %v1826, 0.5
        %v1843 = vadd.f32 %v1827, 0.5
        %v1844 = vadd.f32 %v1828, 0.5
        %v1845 = vadd.f32 %v1829, 0.5
        %v1846 = vadd.f32 %v1830, 0.5
        %v1847 = vadd.f32 %v1831, 0.5
        %v1848 = vadd.f32 %v1832, 0.5
        %v1849 = vadd.f32 %v1833, 0.5
        %v1850 = vadd.f32 %v1834, 0.5
        %v1851 = vadd.f32 %v1835, 0.5
        %v1852 = vadd.f32 %v1836, 0.5
        %v1853 = vadd.f32 %v1837, 0.5
        %v1854 = vadd.f32 %v1838, 0.5
        %v1855 = vadd.f32 %v1839, 0.5
        %v1856 = vadd.f32 %v1840, 0.5
        %v1857 = vadd.f32 %v1841, 0.5
        %v1858 = vmul.f32 %v1778, %v1842
        %v1859 = vmul.f32 %v1779, %v1843
        %v1860 = vmul.f32 %v1780, %v1844
        %v1861 = vmul.f32 %v1781, %v1845
        %v1862 = vmul.f32 %v1782, %v1846
        %v1863 = vmul.f32 %v1783, %v1847
        %v1864 = vmul.f32 %v1784, %v1848
        %v1865 = vmul.f32 %v1785, %v1849
        %v1866 = vmul.f32 %v1786, %v1850
        %v1867 = vmul.f32 %v1787, %v1851
        %v1868 = vmul.f32 %v1788, %v1852
        %v1869 = vmul.f32 %v1789, %v1853
        %v1870 = vmul.f32 %v1790, %v1854
        %v1871 = vmul.f32 %v1791, %v1855
        %v1872 = vmul.f32 %v1792, %v1856
        %v1873 = vmul.f32 %v1793, %v1857
        %v1874 = vld [vmem:[%s11] sm:$0xf]
        %v1875 = vld [vmem:[%s11 + $0x4] sm:$0xf]
        %v1876 = vld [vmem:[%s11 + $0x8] sm:$0xf]
        %v1877 = vld [vmem:[%s11 + $0xc] sm:$0xf]
        %v1878 = vld [vmem:[%s11 + $0x10] sm:$0xf]
        %v1879 = vld [vmem:[%s11 + $0x14] sm:$0xf]
        %v1880 = vld [vmem:[%s11 + $0x18] sm:$0xf]
        %v1881 = vld [vmem:[%s11 + $0x1c] sm:$0xf]
        %v1882 = vpack.c.bf16 %v1860, %v1858
        %v1883 = vpack.c.bf16 %v1861, %v1859
        %v1884 = vpack.c.bf16 %v1864, %v1862
        %v1885 = vpack.c.bf16 %v1865, %v1863
        %v1886 = vpack.c.bf16 %v1868, %v1866
        %v1887 = vpack.c.bf16 %v1869, %v1867
        %v1888 = vpack.c.bf16 %v1872, %v1870
        %v1889 = vpack.c.bf16 %v1873, %v1871
        %v1890 = vld [vmem:[%s12] sm:$0xff]
        %v1891 = vld [vmem:[%s12 + $0x8] sm:$0xff]
        %v1892 = vld [vmem:[%s12 + $0x10] sm:$0xff]
        %v1893 = vld [vmem:[%s12 + $0x18] sm:$0xff]
        %v1894 = vld [vmem:[%s12 + $0x20] sm:$0xff]
        %v1895 = vld [vmem:[%s12 + $0x28] sm:$0xff]
        %v1896 = vld [vmem:[%s12 + $0x30] sm:$0xff]
        %v1897 = vld [vmem:[%s12 + $0x38] sm:$0xff]
        %1899 = vset.pattern.permute.xlu0 0
        %1900 = vperm.xlu0 %1899, %v1890
        %v1901 = vpop.permute.xlu0 %1900
        %1904 = vset.pattern.permute.xlu0 0
        %1905 = vperm.xlu0 %1904, %v1891
        %v1906 = vpop.permute.xlu0 %1905
        %1909 = vset.pattern.permute.xlu0 0
        %1910 = vperm.xlu0 %1909, %v1892
        %v1911 = vpop.permute.xlu0 %1910
        %1914 = vset.pattern.permute.xlu0 0
        %1915 = vperm.xlu0 %1914, %v1893
        %v1916 = vpop.permute.xlu0 %1915
        %1919 = vset.pattern.permute.xlu0 0
        %1920 = vperm.xlu0 %1919, %v1894
        %v1921 = vpop.permute.xlu0 %1920
        %1924 = vset.pattern.permute.xlu0 0
        %1925 = vperm.xlu0 %1924, %v1895
        %v1926 = vpop.permute.xlu0 %1925
        %1929 = vset.pattern.permute.xlu0 0
        %1930 = vperm.xlu0 %1929, %v1896
        %v1931 = vpop.permute.xlu0 %1930
        %1934 = vset.pattern.permute.xlu0 0
        %1935 = vperm.xlu0 %1934, %v1897
        %v1936 = vpop.permute.xlu0 %1935
        %v1946 = vunpack.c.l.b16 %v1874
        %v1947 = vunpack.c.l.b16 %v1875
        %v1948 = vunpack.c.l.b16 %v1876
        %v1949 = vunpack.c.l.b16 %v1877
        %v1950 = vunpack.c.l.b16 %v1878
        %v1951 = vunpack.c.l.b16 %v1879
        %v1952 = vunpack.c.l.b16 %v1880
        %v1953 = vunpack.c.l.b16 %v1881
        %v1954 = vpack.c.b16 %v1947, %v1946
        %v1955 = vpack.c.b16 %v1949, %v1948
        %v1956 = vpack.c.b16 %v1951, %v1950
        %v1957 = vpack.c.b16 %v1953, %v1952
        %v1959 = vsel %vm929, %v1954, 0
        %v1962 = vsel %vm929, %v1955, 0
        %v1965 = vsel %vm929, %v1956, 0
        %v1968 = vsel %vm929, %v1957, 0
        %1970 = vmatprep.subr.bf16.mxu0 %v1883
        %1971 = vmatpush1.bf16.msra.mxu0 %v1882
        %1972 = vmatprep.subr.bf16.mxu0 %v1885
        %1973 = vmatpush1.bf16.msra.mxu0 %v1884
        %1974 = vmatprep.subr.bf16.mxu0 %v1887
        %1975 = vmatpush1.bf16.msra.mxu0 %v1886
        %1976 = vmatprep.subr.bf16.mxu0 %v1889
        %1977 = vmatpush1.bf16.msra.mxu0 %v1888
        %1978 = vmatprep.subr.bf16.mxu0 0
        %1979 = vmatpush1.bf16.msra.mxu0 0
        %1980 = vmatprep.subr.bf16.mxu0 0
        %1981 = vmatpush1.bf16.msra.mxu0 0
        %1982 = vmatprep.subr.bf16.mxu0 0
        %1983 = vmatpush1.bf16.msra.mxu0 0
        %1984 = vmatprep.subr.bf16.mxu0 0
        %1985 = vmatpush1.bf16.msra.mxu0 0
        %1986 = vmatprep.subr.bf16.mxu0 0
        %1987 = vmatpush1.bf16.msra.mxu0 0
        %1988 = vmatprep.subr.bf16.mxu0 0
        %1989 = vmatpush1.bf16.msra.mxu0 0
        %1990 = vmatprep.subr.bf16.mxu0 0
        %1991 = vmatpush1.bf16.msra.mxu0 0
        %1992 = vmatprep.subr.bf16.mxu0 0
        %1993 = vmatpush1.bf16.msra.mxu0 0
        %1994 = vmatprep.subr.bf16.mxu0 0
        %1995 = vmatpush1.bf16.msra.mxu0 0
        %1996 = vmatprep.subr.bf16.mxu0 0
        %1997 = vmatpush1.bf16.msra.mxu0 0
        %1998 = vmatprep.subr.bf16.mxu0 0
        %1999 = vmatpush1.bf16.msra.mxu0 0
        %2000 = vmatprep.subr.bf16.mxu0 0
        %2001 = vmatpush1.bf16.msra.mxu0 0
        %2002 = vmatprep.mubr.bf16.mxu0 0
        %2003 = vmatmul.mubr.bf16.gmra.mrb[0].mxu0 %v1959
        %v2004 = vpop.f32.mrb[0].mxu0
        %v2005 = vadd.f32 %v1901, %v2004
        %v2006 = vpop.f32.mrb[0].mxu0
        %v2007 = vadd.f32 %v1901, %v2006
        %v2008 = vpop.f32.mrb[0].mxu0
        %v2009 = vadd.f32 %v1906, %v2008
        %v2010 = vpop.f32.mrb[0].mxu0
        %v2011 = vadd.f32 %v1906, %v2010
        %2012 = vmatprep.mubr.bf16.mxu0 0
        %2013 = vmatmul.mubr.bf16.gmra.mrb[0].mxu0 %v1962
        %v2014 = vpop.f32.mrb[0].mxu0
        %v2015 = vadd.f32 %v1911, %v2014
        %v2016 = vpop.f32.mrb[0].mxu0
        %v2017 = vadd.f32 %v1911, %v2016
        %v2018 = vpop.f32.mrb[0].mxu0
        %v2019 = vadd.f32 %v1916, %v2018
        %v2020 = vpop.f32.mrb[0].mxu0
        %v2021 = vadd.f32 %v1916, %v2020
        %2022 = vmatprep.mubr.bf16.mxu0 0
        %2023 = vmatmul.mubr.bf16.gmra.mrb[0].mxu0 %v1965
        %v2024 = vpop.f32.mrb[0].mxu0
        %v2025 = vadd.f32 %v1921, %v2024
        %v2026 = vpop.f32.mrb[0].mxu0
        %v2027 = vadd.f32 %v1921, %v2026
        %v2028 = vpop.f32.mrb[0].mxu0
        %v2029 = vadd.f32 %v1926, %v2028
        %v2030 = vpop.f32.mrb[0].mxu0
        %v2031 = vadd.f32 %v1926, %v2030
        %2032 = vmatprep.mubr.bf16.mxu0 0
        %2033 = vmatmul.mubr.bf16.gmra.mrb[0].mxu0 %v1968
        %v2034 = vpop.f32.mrb[0].mxu0
        %v2035 = vadd.f32 %v1931, %v2034
        %v2036 = vpop.f32.mrb[0].mxu0
        %v2037 = vadd.f32 %v1931, %v2036
        %v2038 = vpop.f32.mrb[0].mxu0
        %v2039 = vadd.f32 %v1936, %v2038
        %v2040 = vpop.f32.mrb[0].mxu0
        %v2041 = vadd.f32 %v1936, %v2040
        %2042 = vdwg.mxu0
        %v2043 = vmul.f32 %v2005, 0.5
        %v2044 = vmul.f32 %v2007, 0.5
        %v2045 = vmul.f32 %v2009, 0.5
        %v2046 = vmul.f32 %v2011, 0.5
        %v2047 = vmul.f32 %v2015, 0.5
        %v2048 = vmul.f32 %v2017, 0.5
        %v2049 = vmul.f32 %v2019, 0.5
        %v2050 = vmul.f32 %v2021, 0.5
        %v2051 = vmul.f32 %v2025, 0.5
        %v2052 = vmul.f32 %v2027, 0.5
        %v2053 = vmul.f32 %v2029, 0.5
        %v2054 = vmul.f32 %v2031, 0.5
        %v2055 = vmul.f32 %v2035, 0.5
        %v2056 = vmul.f32 %v2037, 0.5
        %v2057 = vmul.f32 %v2039, 0.5
        %v2058 = vmul.f32 %v2041, 0.5
        %v2059 = vtanh.pop %v2043
        %v2060 = vtanh.pop %v2044
        %v2061 = vtanh.pop %v2045
        %v2062 = vtanh.pop %v2046
        %v2063 = vtanh.pop %v2047
        %v2064 = vtanh.pop %v2048
        %v2065 = vtanh.pop %v2049
        %v2066 = vtanh.pop %v2050
        %v2067 = vtanh.pop %v2051
        %v2068 = vtanh.pop %v2052
        %v2069 = vtanh.pop %v2053
        %v2070 = vtanh.pop %v2054
        %v2071 = vtanh.pop %v2055
        %v2072 = vtanh.pop %v2056
        %v2073 = vtanh.pop %v2057
        %v2074 = vtanh.pop %v2058
        %v2075 = vmul.f32 %v2059, 0.5
        %v2076 = vmul.f32 %v2060, 0.5
        %v2077 = vmul.f32 %v2061, 0.5
        %v2078 = vmul.f32 %v2062, 0.5
        %v2079 = vmul.f32 %v2063, 0.5
        %v2080 = vmul.f32 %v2064, 0.5
        %v2081 = vmul.f32 %v2065, 0.5
        %v2082 = vmul.f32 %v2066, 0.5
        %v2083 = vmul.f32 %v2067, 0.5
        %v2084 = vmul.f32 %v2068, 0.5
        %v2085 = vmul.f32 %v2069, 0.5
        %v2086 = vmul.f32 %v2070, 0.5
        %v2087 = vmul.f32 %v2071, 0.5
        %v2088 = vmul.f32 %v2072, 0.5
        %v2089 = vmul.f32 %v2073, 0.5
        %v2090 = vmul.f32 %v2074, 0.5
        %v2091 = vadd.f32 %v2075, 0.5
        %v2092 = vadd.f32 %v2076, 0.5
        %v2093 = vadd.f32 %v2077, 0.5
        %v2094 = vadd.f32 %v2078, 0.5
        %v2095 = vadd.f32 %v2079, 0.5
        %v2096 = vadd.f32 %v2080, 0.5
        %v2097 = vadd.f32 %v2081, 0.5
        %v2098 = vadd.f32 %v2082, 0.5
        %v2099 = vadd.f32 %v2083, 0.5
        %v2100 = vadd.f32 %v2084, 0.5
        %v2101 = vadd.f32 %v2085, 0.5
        %v2102 = vadd.f32 %v2086, 0.5
        %v2103 = vadd.f32 %v2087, 0.5
        %v2104 = vadd.f32 %v2088, 0.5
        %v2105 = vadd.f32 %v2089, 0.5
        %v2106 = vadd.f32 %v2090, 0.5
        %v2107 = vmul.f32 %v2005, %v2091
        %v2108 = vmul.f32 %v2007, %v2092
        %v2109 = vmul.f32 %v2009, %v2093
        %v2110 = vmul.f32 %v2011, %v2094
        %v2111 = vmul.f32 %v2015, %v2095
        %v2112 = vmul.f32 %v2017, %v2096
        %v2113 = vmul.f32 %v2019, %v2097
        %v2114 = vmul.f32 %v2021, %v2098
        %v2115 = vmul.f32 %v2025, %v2099
        %v2116 = vmul.f32 %v2027, %v2100
        %v2117 = vmul.f32 %v2029, %v2101
        %v2118 = vmul.f32 %v2031, %v2102
        %v2119 = vmul.f32 %v2035, %v2103
        %v2120 = vmul.f32 %v2037, %v2104
        %v2121 = vmul.f32 %v2039, %v2105
        %v2122 = vmul.f32 %v2041, %v2106
        %v2123 = vld [vmem:[%s13] sm:$0xf]
        %v2124 = vld [vmem:[%s13 + $0x4] sm:$0xf]
        %v2125 = vld [vmem:[%s13 + $0x8] sm:$0xf]
        %v2126 = vld [vmem:[%s13 + $0xc] sm:$0xf]
        %v2127 = vld [vmem:[%s13 + $0x10] sm:$0xf]
        %v2128 = vld [vmem:[%s13 + $0x14] sm:$0xf]
        %v2129 = vld [vmem:[%s13 + $0x18] sm:$0xf]
        %v2130 = vld [vmem:[%s13 + $0x1c] sm:$0xf]
        %v2131 = vpack.c.bf16 %v2109, %v2107
        %v2132 = vpack.c.bf16 %v2110, %v2108
        %v2133 = vpack.c.bf16 %v2113, %v2111
        %v2134 = vpack.c.bf16 %v2114, %v2112
        %v2135 = vpack.c.bf16 %v2117, %v2115
        %v2136 = vpack.c.bf16 %v2118, %v2116
        %v2137 = vpack.c.bf16 %v2121, %v2119
        %v2138 = vpack.c.bf16 %v2122, %v2120
        %v2139 = vld [vmem:[%s14] sm:$0xff]
        %v2140 = vld [vmem:[%s14 + $0x8] sm:$0xff]
        %v2141 = vld [vmem:[%s14 + $0x10] sm:$0xff]
        %v2142 = vld [vmem:[%s14 + $0x18] sm:$0xff]
        %v2143 = vld [vmem:[%s14 + $0x20] sm:$0xff]
        %v2144 = vld [vmem:[%s14 + $0x28] sm:$0xff]
        %v2145 = vld [vmem:[%s14 + $0x30] sm:$0xff]
        %v2146 = vld [vmem:[%s14 + $0x38] sm:$0xff]
        %2148 = vset.pattern.permute.xlu0 0
        %2149 = vperm.xlu0 %2148, %v2139
        %v2150 = vpop.permute.xlu0 %2149
        %2153 = vset.pattern.permute.xlu0 0
        %2154 = vperm.xlu0 %2153, %v2140
        %v2155 = vpop.permute.xlu0 %2154
        %2158 = vset.pattern.permute.xlu0 0
        %2159 = vperm.xlu0 %2158, %v2141
        %v2160 = vpop.permute.xlu0 %2159
        %2163 = vset.pattern.permute.xlu0 0
        %2164 = vperm.xlu0 %2163, %v2142
        %v2165 = vpop.permute.xlu0 %2164
        %2168 = vset.pattern.permute.xlu0 0
        %2169 = vperm.xlu0 %2168, %v2143
        %v2170 = vpop.permute.xlu0 %2169
        %2173 = vset.pattern.permute.xlu0 0
        %2174 = vperm.xlu0 %2173, %v2144
        %v2175 = vpop.permute.xlu0 %2174
        %2178 = vset.pattern.permute.xlu0 0
        %2179 = vperm.xlu0 %2178, %v2145
        %v2180 = vpop.permute.xlu0 %2179
        %2183 = vset.pattern.permute.xlu0 0
        %2184 = vperm.xlu0 %2183, %v2146
        %v2185 = vpop.permute.xlu0 %2184
        %v2195 = vunpack.c.l.b16 %v2123
        %v2196 = vunpack.c.l.b16 %v2124
        %v2197 = vunpack.c.l.b16 %v2125
        %v2198 = vunpack.c.l.b16 %v2126
        %v2199 = vunpack.c.l.b16 %v2127
        %v2200 = vunpack.c.l.b16 %v2128
        %v2201 = vunpack.c.l.b16 %v2129
        %v2202 = vunpack.c.l.b16 %v2130
        %v2203 = vpack.c.b16 %v2196, %v2195
        %v2204 = vpack.c.b16 %v2198, %v2197
        %v2205 = vpack.c.b16 %v2200, %v2199
        %v2206 = vpack.c.b16 %v2202, %v2201
        %v2208 = vsel %vm929, %v2203, 0
        %v2211 = vsel %vm929, %v2204, 0
        %v2214 = vsel %vm929, %v2205, 0
        %v2217 = vsel %vm929, %v2206, 0
        %2219 = vmatprep.subr.bf16.mxu0 %v2132
        %2220 = vmatpush1.bf16.msra.mxu0 %v2131
        %2221 = vmatprep.subr.bf16.mxu0 %v2134
        %2222 = vmatpush1.bf16.msra.mxu0 %v2133
        %2223 = vmatprep.subr.bf16.mxu0 %v2136
        %2224 = vmatpush1.bf16.msra.mxu0 %v2135
        %2225 = vmatprep.subr.bf16.mxu0 %v2138
        %2226 = vmatpush1.bf16.msra.mxu0 %v2137
        %2227 = vmatprep.subr.bf16.mxu0 0
        %2228 = vmatpush1.bf16.msra.mxu0 0
        %2229 = vmatprep.subr.bf16.mxu0 0
        %2230 = vmatpush1.bf16.msra.mxu0 0
        %2231 = vmatprep.subr.bf16.mxu0 0
        %2232 = vmatpush1.bf16.msra.mxu0 0
        %2233 = vmatprep.subr.bf16.mxu0 0
        %2234 = vmatpush1.bf16.msra.mxu0 0
        %2235 = vmatprep.subr.bf16.mxu0 0
        %2236 = vmatpush1.bf16.msra.mxu0 0
        %2237 = vmatprep.subr.bf16.mxu0 0
        %2238 = vmatpush1.bf16.msra.mxu0 0
        %2239 = vmatprep.subr.bf16.mxu0 0
        %2240 = vmatpush1.bf16.msra.mxu0 0
        %2241 = vmatprep.subr.bf16.mxu0 0
        %2242 = vmatpush1.bf16.msra.mxu0 0
        %2243 = vmatprep.subr.bf16.mxu0 0
        %2244 = vmatpush1.bf16.msra.mxu0 0
        %2245 = vmatprep.subr.bf16.mxu0 0
        %2246 = vmatpush1.bf16.msra.mxu0 0
        %2247 = vmatprep.subr.bf16.mxu0 0
        %2248 = vmatpush1.bf16.msra.mxu0 0
        %2249 = vmatprep.subr.bf16.mxu0 0
        %2250 = vmatpush1.bf16.msra.mxu0 0
        %2251 = vmatprep.mubr.bf16.mxu0 0
        %2252 = vmatmul.mubr.bf16.gmra.mrb[0].mxu0 %v2208
        %v2253 = vpop.f32.mrb[0].mxu0
        %v2254 = vadd.f32 %v2150, %v2253
        %v2255 = vpop.f32.mrb[0].mxu0
        %v2256 = vadd.f32 %v2150, %v2255
        %v2257 = vpop.f32.mrb[0].mxu0
        %v2258 = vadd.f32 %v2155, %v2257
        %v2259 = vpop.f32.mrb[0].mxu0
        %v2260 = vadd.f32 %v2155, %v2259
        %2261 = vmatprep.mubr.bf16.mxu0 0
        %2262 = vmatmul.mubr.bf16.gmra.mrb[0].mxu0 %v2211
        %v2263 = vpop.f32.mrb[0].mxu0
        %v2264 = vadd.f32 %v2160, %v2263
        %v2265 = vpop.f32.mrb[0].mxu0
        %v2266 = vadd.f32 %v2160, %v2265
        %v2267 = vpop.f32.mrb[0].mxu0
        %v2268 = vadd.f32 %v2165, %v2267
        %v2269 = vpop.f32.mrb[0].mxu0
        %v2270 = vadd.f32 %v2165, %v2269
        %2271 = vmatprep.mubr.bf16.mxu0 0
        %2272 = vmatmul.mubr.bf16.gmra.mrb[0].mxu0 %v2214
        %v2273 = vpop.f32.mrb[0].mxu0
        %v2274 = vadd.f32 %v2170, %v2273
        %v2275 = vpop.f32.mrb[0].mxu0
        %v2276 = vadd.f32 %v2170, %v2275
        %v2277 = vpop.f32.mrb[0].mxu0
        %v2278 = vadd.f32 %v2175, %v2277
        %v2279 = vpop.f32.mrb[0].mxu0
        %v2280 = vadd.f32 %v2175, %v2279
        %2281 = vmatprep.mubr.bf16.mxu0 0
        %2282 = vmatmul.mubr.bf16.gmra.mrb[0].mxu0 %v2217
        %v2283 = vpop.f32.mrb[0].mxu0
        %v2284 = vadd.f32 %v2180, %v2283
        %v2285 = vpop.f32.mrb[0].mxu0
        %v2286 = vadd.f32 %v2180, %v2285
        %v2287 = vpop.f32.mrb[0].mxu0
        %v2288 = vadd.f32 %v2185, %v2287
        %v2289 = vpop.f32.mrb[0].mxu0
        %v2290 = vadd.f32 %v2185, %v2289
        %2291 = vdwg.mxu0
        %v2292 = vadd.f32 %v1858, %v2254
        %v2293 = vadd.f32 %v1859, %v2256
        %v2294 = vadd.f32 %v1860, %v2258
        %v2295 = vadd.f32 %v1861, %v2260
        %v2296 = vadd.f32 %v1862, %v2264
        %v2297 = vadd.f32 %v1863, %v2266
        %v2298 = vadd.f32 %v1864, %v2268
        %v2299 = vadd.f32 %v1865, %v2270
        %v2300 = vadd.f32 %v1866, %v2274
        %v2301 = vadd.f32 %v1867, %v2276
        %v2302 = vadd.f32 %v1868, %v2278
        %v2303 = vadd.f32 %v1869, %v2280
        %v2304 = vadd.f32 %v1870, %v2284
        %v2305 = vadd.f32 %v1871, %v2286
        %v2306 = vadd.f32 %v1872, %v2288
        %v2307 = vadd.f32 %v1873, %v2290
        %v2308 = vmul.f32 %v2292, 0.5
        %v2309 = vmul.f32 %v2293, 0.5
        %v2310 = vmul.f32 %v2294, 0.5
        %v2311 = vmul.f32 %v2295, 0.5
        %v2312 = vmul.f32 %v2296, 0.5
        %v2313 = vmul.f32 %v2297, 0.5
        %v2314 = vmul.f32 %v2298, 0.5
        %v2315 = vmul.f32 %v2299, 0.5
        %v2316 = vmul.f32 %v2300, 0.5
        %v2317 = vmul.f32 %v2301, 0.5
        %v2318 = vmul.f32 %v2302, 0.5
        %v2319 = vmul.f32 %v2303, 0.5
        %v2320 = vmul.f32 %v2304, 0.5
        %v2321 = vmul.f32 %v2305, 0.5
        %v2322 = vmul.f32 %v2306, 0.5
        %v2323 = vmul.f32 %v2307, 0.5
        %v2324 = vtanh.pop %v2308
        %v2325 = vtanh.pop %v2309
        %v2326 = vtanh.pop %v2310
        %v2327 = vtanh.pop %v2311
        %v2328 = vtanh.pop %v2312
        %v2329 = vtanh.pop %v2313
        %v2330 = vtanh.pop %v2314
        %v2331 = vtanh.pop %v2315
        %v2332 = vtanh.pop %v2316
        %v2333 = vtanh.pop %v2317
        %v2334 = vtanh.pop %v2318
        %v2335 = vtanh.pop %v2319
        %v2336 = vtanh.pop %v2320
        %v2337 = vtanh.pop %v2321
        %v2338 = vtanh.pop %v2322
        %v2339 = vtanh.pop %v2323
        %v2340 = vmul.f32 %v2324, 0.5
        %v2341 = vmul.f32 %v2325, 0.5
        %v2342 = vmul.f32 %v2326, 0.5
        %v2343 = vmul.f32 %v2327, 0.5
        %v2344 = vmul.f32 %v2328, 0.5
        %v2345 = vmul.f32 %v2329, 0.5
        %v2346 = vmul.f32 %v2330, 0.5
        %v2347 = vmul.f32 %v2331, 0.5
        %v2348 = vmul.f32 %v2332, 0.5
        %v2349 = vmul.f32 %v2333, 0.5
        %v2350 = vmul.f32 %v2334, 0.5
        %v2351 = vmul.f32 %v2335, 0.5
        %v2352 = vmul.f32 %v2336, 0.5
        %v2353 = vmul.f32 %v2337, 0.5
        %v2354 = vmul.f32 %v2338, 0.5
        %v2355 = vmul.f32 %v2339, 0.5
        %v2356 = vadd.f32 %v2340, 0.5
        %v2357 = vadd.f32 %v2341, 0.5
        %v2358 = vadd.f32 %v2342, 0.5
        %v2359 = vadd.f32 %v2343, 0.5
        %v2360 = vadd.f32 %v2344, 0.5
        %v2361 = vadd.f32 %v2345, 0.5
        %v2362 = vadd.f32 %v2346, 0.5
        %v2363 = vadd.f32 %v2347, 0.5
        %v2364 = vadd.f32 %v2348, 0.5
        %v2365 = vadd.f32 %v2349, 0.5
        %v2366 = vadd.f32 %v2350, 0.5
        %v2367 = vadd.f32 %v2351, 0.5
        %v2368 = vadd.f32 %v2352, 0.5
        %v2369 = vadd.f32 %v2353, 0.5
        %v2370 = vadd.f32 %v2354, 0.5
        %v2371 = vadd.f32 %v2355, 0.5
        %v2372 = vmul.f32 %v2292, %v2356
        %v2373 = vmul.f32 %v2293, %v2357
        %v2374 = vmul.f32 %v2294, %v2358
        %v2375 = vmul.f32 %v2295, %v2359
        %v2376 = vmul.f32 %v2296, %v2360
        %v2377 = vmul.f32 %v2297, %v2361
        %v2378 = vmul.f32 %v2298, %v2362
        %v2379 = vmul.f32 %v2299, %v2363
        %v2380 = vmul.f32 %v2300, %v2364
        %v2381 = vmul.f32 %v2301, %v2365
        %v2382 = vmul.f32 %v2302, %v2366
        %v2383 = vmul.f32 %v2303, %v2367
        %v2384 = vmul.f32 %v2304, %v2368
        %v2385 = vmul.f32 %v2305, %v2369
        %v2386 = vmul.f32 %v2306, %v2370
        %v2387 = vmul.f32 %v2307, %v2371
        %v2388 = vld [vmem:[%s15] sm:$0xff]
        %v2389 = vld [vmem:[%s15 + $0x8] sm:$0xff]
        %v2390 = vld [vmem:[%s15 + $0x10] sm:$0xff]
        %v2391 = vld [vmem:[%s15 + $0x18] sm:$0xff]
        %v2392 = vld [vmem:[%s15 + $0x20] sm:$0xff]
        %v2393 = vld [vmem:[%s15 + $0x28] sm:$0xff]
        %v2394 = vld [vmem:[%s15 + $0x30] sm:$0xff]
        %v2395 = vld [vmem:[%s15 + $0x38] sm:$0xff]
        %2397 = vset.pattern.permute.xlu0 0
        %2398 = vperm.xlu0 %2397, %v2388
        %v2399 = vpop.permute.xlu0 %2398
        %2402 = vset.pattern.permute.xlu0 0
        %2403 = vperm.xlu0 %2402, %v2389
        %v2404 = vpop.permute.xlu0 %2403
        %2407 = vset.pattern.permute.xlu0 0
        %2408 = vperm.xlu0 %2407, %v2390
        %v2409 = vpop.permute.xlu0 %2408
        %2412 = vset.pattern.permute.xlu0 0
        %2413 = vperm.xlu0 %2412, %v2391
        %v2414 = vpop.permute.xlu0 %2413
        %2417 = vset.pattern.permute.xlu0 0
        %2418 = vperm.xlu0 %2417, %v2392
        %v2419 = vpop.permute.xlu0 %2418
        %2422 = vset.pattern.permute.xlu0 0
        %2423 = vperm.xlu0 %2422, %v2393
        %v2424 = vpop.permute.xlu0 %2423
        %2427 = vset.pattern.permute.xlu0 0
        %2428 = vperm.xlu0 %2427, %v2394
        %v2429 = vpop.permute.xlu0 %2428
        %2432 = vset.pattern.permute.xlu0 0
        %2433 = vperm.xlu0 %2432, %v2395
        %v2434 = vpop.permute.xlu0 %2433
        %v2436 = vmul.f32 %v2372, %v2399
        %v2437 = vmul.f32 %v2373, %v2399
        %v2438 = vmul.f32 %v2374, %v2404
        %v2439 = vmul.f32 %v2375, %v2404
        %v2440 = vmul.f32 %v2376, %v2409
        %v2441 = vmul.f32 %v2377, %v2409
        %v2442 = vmul.f32 %v2378, %v2414
        %v2443 = vmul.f32 %v2379, %v2414
        %v2444 = vmul.f32 %v2380, %v2419
        %v2445 = vmul.f32 %v2381, %v2419
        %v2446 = vmul.f32 %v2382, %v2424
        %v2447 = vmul.f32 %v2383, %v2424
        %v2448 = vmul.f32 %v2384, %v2429
        %v2449 = vmul.f32 %v2385, %v2429
        %v2450 = vmul.f32 %v2386, %v2434
        %v2451 = vmul.f32 %v2387, %v2434
        %v2452 = vadd.f32 %v2436, %v2438
        %v2453 = vadd.f32 %v2452, %v2440
        %v2454 = vadd.f32 %v2453, %v2442
        %v2455 = vadd.f32 %v2454, %v2444
        %v2456 = vadd.f32 %v2455, %v2446
        %v2457 = vadd.f32 %v2456, %v2448
        %v2458 = vadd.f32 %v2457, %v2450
        %v2459 = vrot.slane %v2458, 4
        %v2460 = vadd.f32 %v2458, %v2459
        %v2461 = vrot.slane %v2460, 2
        %v2462 = vadd.f32 %v2460, %v2461
        %v2463 = vrot.slane %v2462, 1
        %v2464 = vadd.f32 %v2462, %v2463
        %v2465 = vadd.f32 %v2437, %v2439
        %v2466 = vadd.f32 %v2465, %v2441
        %v2467 = vadd.f32 %v2466, %v2443
        %v2468 = vadd.f32 %v2467, %v2445
        %v2469 = vadd.f32 %v2468, %v2447
        %v2470 = vadd.f32 %v2469, %v2449
        %v2471 = vadd.f32 %v2470, %v2451
        %v2472 = vrot.slane %v2471, 4
        %v2473 = vadd.f32 %v2471, %v2472
        %v2474 = vrot.slane %v2473, 2
        %v2475 = vadd.f32 %v2473, %v2474
        %v2476 = vrot.slane %v2475, 1
        %v2477 = vadd.f32 %v2475, %v2476
        %v2478 = vld [vmem:[#allocation2] sm:$0x1]
        %2480 = vset.pattern.permute.xlu0 0
        %2481 = vperm.xlu0 %2480, %v2478
        %v2482 = vpop.permute.xlu0 %2481
        %v2484 = vlaneseq
        %v2485 = vshrl.u32 %v2484, 7
        %v2486 = vsub.s32 0, %v2485
        %v2487 = vrot.slane %v2482, %v2486
        %v2488 = vadd.f32 %v2464, %v2487
        %v2489 = vadd.f32 %v2477, %v2487
        %v2492 = vcombine.low %v2488, %v2489
        %v2494 = vunpack.c.l.s4 1966171168
        %v2495 = vunpack.c.0.s8 %v2494
        %v2496 = vlaneseq
        %v2497 = vshrl.u32 %v2496, 7
        %v2498 = vsub.s32 %v2495, %v2497
        %v2499 = vrot.slane %v2492, %v2498
        %v2501 = vunpack.c.l.s4 1966171168
        %v2502 = vunpack.c.0.s8 %v2501
        %v2503 = vlaneseq
        %v2504 = vshrl.u32 %v2503, 7
        %v2505 = vsub.s32 %v2502, %v2504
        %v2506 = vrot.slane %v2499, %v2505
        %v2508 = vlaneseq
        %vm2509 = vcmp.ge.s32.totalorder %v2508, 0
        %vm2510 = vcmp.lt.s32.totalorder %v2508, 256
        %vm2511 = vmand %vm2509, %vm2510
        %2512 = vst.msk [vmem:[%s587] sm:$0x3] %vm2511, %v2506
        %s2513 = sand.u32 %s403, 1
        %s2514 = scalar_lea.sflag [#allocation5], %s2513
        %s2515 = sand.u32 %s403, 1
        %s2516 = smul.addr %s2515, 2
        %s2517 = scalar_lea.vmem [#allocation4], %s2516
        // Predicated region
        $region127: #{basenet_forward.1} parent=121 // pred_check
          %p2518 = pneg %p413
        $region128: #{basenet_forward.1} parent=121 // pred_check_branch
          %2520 = sbr.rel (%p2518) target = $region130
        $region129: #{basenet_forward.1} parent=121 // pred_region
          %s2521 = smul.u32 2, %s33
          %s2523 = ssub.s32 32, 32
          %2524 = vsyncadd %s2514, %s2523
          %s2525 = smul.addr %s2521, 16
          %s2526 = scalar_lea.hbm %s17, %s2525
          %s2528 = sshll.u32 %s2517, 4
          %s2529 = int_to_ptr.vmem [resolvable:$true] %s2528
          %2531 = dma.vmem_to_hbm [thread:$0]  %s2529, 32, %s2526, %s2514
        $region130: #{basenet_forward.1} parent=121 // pred_fallthru
          _
      $region122: #{basenet_forward.1} parent=5 // pred_fallthru
        _
      %p2532 = scmp.le.s32.totalorder 2, %s28
      // Predicated region
      $region131: #{basenet_forward.1} parent=5 // pred_check
        %p2533 = pneg %p2532
      $region132: #{basenet_forward.1} parent=5 // pred_check_branch
        %2535 = sbr.rel (%p2533) target = $region134
      $region133: #{basenet_forward.1} parent=5 // pred_region
        %s2536 = ssub.s32 %s28, 2
        // Predicated region
        $region135: #{basenet_forward.1} parent=133 // pred_check
          %p2537 = pneg %p419
        $region136: #{basenet_forward.1} parent=133 // pred_check_branch
          %2539 = sbr.rel (%p2537) target = $region138
        $region137: #{basenet_forward.1} parent=133 // pred_region
          %s2540 = sand.u32 %s404, 1
          %s2541 = scalar_lea.sflag [#allocation5], %s2540
          %s2542 = sand.u32 %s404, 1
          %s2543 = smul.addr %s2542, 2
          %s2544 = scalar_lea.vmem [#allocation4], %s2543
          %2545 = dma.done %s2541, 32
        $region138: #{basenet_forward.1} parent=133 // pred_fallthru
          _
      $region134: #{basenet_forward.1} parent=5 // pred_fallthru
        _
    $region6: #{basenet_forward.1} parent=1 // loop_footer
      %s32 = sadd.s32 1, %s28
    $region7: #{basenet_forward.1} parent=1 // loop_footer_branch
      %27 = sbr.rel target = $region3
    $region8: #{basenet_forward.1} parent=1 // loop_exit
      _
    %2546 = vsyncpa [#allocation5], 1
    %s2547 = scalar_lea.sflag [#allocation5], 1
    %2548 = vsyncpa %s2547, 1

</llo_original>
